<compile_context>
chip_gen: v7x
topology: tpu7x:2x2x1
jax: 0.10.0
libtpu: 0.0.40
codegen_flags: <defaults>
</compile_context>

<pallas_src>
import functools
import math

import numpy as np
import jax
import jax.numpy as jnp
from jax.experimental import pallas as pl
from jax.experimental.pallas import tpu as pltpu

# ----------------------------------------------------------------------------
# Configuration (mirrors GNNBaseModel.__init__ math)
# ----------------------------------------------------------------------------
CONFIG = dict(num_classes=4, strides=(1, 2), num_layers=2, z_dim=8,
              gf_dim=16, df_dim=16, kernel_height=3, kernel_width=3,
              dilation_rate=1)
D_MODEL = 16
BATCH = 2

STRIDES = [tuple(CONFIG["strides"])] * CONFIG["num_layers"]
_h_d, _w_d = 1, 1
for _s in STRIDES:
    _h_d *= _s[0]
    _w_d *= _s[1]
C_H = int(1 / _h_d)                       # 1
C_W = int(D_MODEL / _w_d)                 # 4

_kh, _kw = CONFIG["kernel_height"], CONFIG["kernel_width"]
if C_H < _kh:
    _kh = C_H
elif C_W < _kw:
    _kw = C_W
KERNEL = (_kh, _kw)                       # (1, 3)

_eph = (KERNEL[0] - 1) * CONFIG["dilation_rate"]
_epw = (KERNEL[1] - 1) * CONFIG["dilation_rate"]
PADDING = [_epw // 2, _epw - _epw // 2, _eph // 2, _eph - _eph // 2]  # [l,r,t,b] = [1,1,0,0]

HIDDEN0 = CONFIG["gf_dim"] * 2 ** (len(STRIDES) - 1)   # 32
NUM_CLASSES = CONFIG["num_classes"]
W_FINAL = C_H * D_MODEL                                 # 16 (final spatial width)
OUT_COLS = NUM_CLASSES * W_FINAL                        # 64
OUT_COLS_PAD = 128                                      # lane-dense store width
LEAKY_SLOPE = 0.01
BN_EPS = 1e-5


# ----------------------------------------------------------------------------
# Parameters (deterministic, synthetic; PyTorch layouts)
# ----------------------------------------------------------------------------
def spectral_normalize(w):
    """Divide weight by its largest singular value (spectral_norm parametrization).
    # TODO(synk): PyTorch uses approximate power-iteration with persistent u/v;
    #             here the exact sigma is used (deterministic, synthetic weights)."""
    w = np.asarray(w, dtype=np.float32)
    sigma = float(np.linalg.svd(w.reshape(w.shape[0], -1), compute_uv=False)[0])
    return w / sigma


def xavier_uniform(key, shape):
    fan_in = shape[1] * shape[2] * shape[3]
    fan_out = shape[0] * shape[2] * shape[3]
    bound = math.sqrt(6.0 / (fan_in + fan_out))
    return jax.random.uniform(key, shape, jnp.float32, -bound, bound)


def build_params(key):
    params = {}
    hidden = HIDDEN0
    in_dim = hidden
    lin_out = C_H * C_W * hidden
    key, k1, k2 = jax.random.split(key, 3)
    bound = 1.0 / math.sqrt(CONFIG["z_dim"])
    lin_w = jax.random.uniform(k1, (lin_out, CONFIG["z_dim"]), jnp.float32, -bound, bound)
    params["lin_w"] = spectral_normalize(lin_w)                     # [out, in] torch layout
    params["lin_b"] = np.asarray(
        jax.random.uniform(k2, (lin_out,), jnp.float32, -bound, bound), np.float32)

    for lid in range(len(STRIDES)):
        key, k1, k2 = jax.random.split(key, 3)
        params[f"conv1_{lid}_w"] = spectral_normalize(
            xavier_uniform(k1, (hidden, in_dim) + KERNEL))          # [Cout,Cin,1,3]
        params[f"conv1_{lid}_b"] = np.zeros((hidden,), np.float32)
        params[f"conv2_{lid}_w"] = spectral_normalize(
            xavier_uniform(k2, (hidden, hidden) + KERNEL))
        params[f"conv2_{lid}_b"] = np.zeros((hidden,), np.float32)
        in_dim = hidden
        hidden = hidden // STRIDES[lid][1]

    key, k = jax.random.split(key)
    params["final_w"] = spectral_normalize(
        xavier_uniform(k, (NUM_CLASSES, in_dim, 1, 1)))
    params["final_b"] = np.zeros((NUM_CLASSES,), np.float32)
    # TODO(synk): attention (att1/att2/att3) weights are not built — the reference
    # multiplies the attention output by torch.zeros(1,1), so it contributes 0.
    return params


# ----------------------------------------------------------------------------
# Host-side weight preprocessing: fold upsample / reflection-pad / conv / 1x1
# conv into dense matrices acting on position-major [rows, W*C] slabs.
# ----------------------------------------------------------------------------
def _reflect_index(p, left, n):
    q = p - left
    if q < 0:
        q = -q
    if q > n - 1:
        q = 2 * (n - 1) - q
    return q


def conv_chain_matrix(w, b, w_in, upsample_w):
    """UpsamplingNearest2d((1,upsample_w)) -> ReflectionPad2d(PADDING) ->
    Conv2d(valid, kernel (1,KW)) composed into one matrix.
    Input/output columns are position-major: col = w * C + c."""
    w = np.asarray(w, np.float32)
    c_out, c_in, kh, kw = w.shape
    assert kh == 1
    left, right = PADDING[0], PADDING[1]
    w_up = w_in * upsample_w
    w_out = w_up + left + right - kw + 1
    mat = np.zeros((w_in * c_in, w_out * c_out), np.float32)
    for wo in range(w_out):
        for k in range(kw):
            wu = _reflect_index(wo + k, left, w_up)       # padded -> upsampled pos
            wi = wu // upsample_w                          # upsampled -> input pos
            mat[wi * c_in:(wi + 1) * c_in,
                wo * c_out:(wo + 1) * c_out] += w[:, :, 0, k].T
    bias = np.tile(np.asarray(b, np.float32), w_out).reshape(1, w_out * c_out)
    return mat, bias


def final_conv_matrix(w, b, w_spatial, out_cols):
    """1x1 conv; input position-major (w*Cin+c), output channel-major (c*W+w)
    so the kernel output reshapes straight to NCHW.  Columns zero-padded to
    `out_cols` (=128) for unmasked lane-dense stores."""
    w = np.asarray(w, np.float32)[:, :, 0, 0]              # [Cout, Cin]
    b = np.asarray(b, np.float32)
    c_out, c_in = w.shape
    assert c_out * w_spatial <= out_cols
    mat = np.zeros((w_spatial * c_in, out_cols), np.float32)
    bias = np.zeros((1, out_cols), np.float32)
    for ws in range(w_spatial):
        for co in range(c_out):
            mat[ws * c_in:(ws + 1) * c_in, co * w_spatial + ws] = w[co, :]
            bias[0, co * w_spatial + ws] = b[co]
    return mat, bias


def bn_reduce_replicate(w_spatial, channels):
    """Small reduce/replicate pair replacing the old dense [W*C, W*C] matrix.
    red: [W*C, C] sums positions per channel; rep: [C, W*C] broadcasts a
    per-channel scalar back to every position of that channel."""
    n = w_spatial * channels
    red = np.zeros((n, channels), np.float32)
    rep = np.zeros((channels, n), np.float32)
    for ws in range(w_spatial):
        for c in range(channels):
            red[ws * channels + c, c] = 1.0
            rep[c, ws * channels + c] = 1.0
    return red, rep


def linear_operands(lin_w, lin_b):
    """Permute the snlinear weight so its output lands directly in the kernel's
    position-major layout (torch reshape is channel-major: idx = c*C_W + w)."""
    n = C_H * C_W * HIDDEN0
    j = np.arange(n)
    perm = (j % HIDDEN0) * (C_H * C_W) + (j // HIDDEN0)
    wk = np.asarray(lin_w, np.float32).T[:, perm]           # [z_dim, 128]
    bk = np.asarray(lin_b, np.float32)[perm].reshape(1, n)
    return wk, bk


def build_kernel_operands(params):
    bf16, f32 = jnp.bfloat16, jnp.float32
    ops = {}
    lw, lb = linear_operands(params["lin_w"], params["lin_b"])
    ops["lin_w"] = jnp.asarray(lw, bf16)
    ops["lin_b"] = jnp.asarray(lb, f32)

    w_cur = C_H * C_W           # spatial width entering layer 0 (H == 1)
    c_cur = HIDDEN0
    for lid in range(len(STRIDES)):
        sw = STRIDES[lid][1]
        ma, ba = conv_chain_matrix(params[f"conv1_{lid}_w"], params[f"conv1_{lid}_b"],
                                   w_cur, sw)
        w_cur = w_cur * sw
        c_cur = params[f"conv1_{lid}_w"].shape[0]
        mb, bb = conv_chain_matrix(params[f"conv2_{lid}_w"], params[f"conv2_{lid}_b"],
                                   w_cur, 1)
        ops[f"ma{lid}"] = jnp.asarray(ma, bf16)
        ops[f"ba{lid}"] = jnp.asarray(ba, f32)
        ops[f"mb{lid}"] = jnp.asarray(mb, bf16)
        ops[f"bb{lid}"] = jnp.asarray(bb, f32)

    red, rep = bn_reduce_replicate(w_cur, c_cur)
    ops["red"] = jnp.asarray(red, f32)      # BN path stays f32 (numerical safety)
    ops["rep"] = jnp.asarray(rep, f32)

    mf, bf = final_conv_matrix(params["final_w"], params["final_b"], w_cur, OUT_COLS_PAD)
    ops["mf"] = jnp.asarray(mf, bf16)
    ops["bf"] = jnp.asarray(bf, f32)
    return ops


# ----------------------------------------------------------------------------
# The single fused Pallas kernel
# ----------------------------------------------------------------------------
def _leaky(v):
    return jnp.where(v >= 0, v, LEAKY_SLOPE * v)


def generator_kernel(z_ref, lw_ref, lb_ref,
                     ma0_ref, ba0_ref, mb0_ref, bb0_ref,
                     ma1_ref, ba1_ref, mb1_ref, bb1_ref,
                     red_ref, rep_ref, mf_ref, bf_ref, o_ref, *, rows_valid):
    f32 = jnp.float32
    bf16 = jnp.bfloat16
    tm = o_ref.shape[0]

    def mm(lhs, w_ref):
        # bf16 x bf16 on the MXU, f32 accumulation.
        return jnp.dot(lhs.astype(bf16), w_ref[...], preferred_element_type=f32)

    # snlinear: [rows, z_dim] -> [rows, W0*C0]  (position-major columns)
    x = mm(z_ref[...], lw_ref) + lb_ref[...]

    def residual_block(x, ma_ref, ba, mb_ref, bb):
        # One RHS push for both the main (leaky(x)) and skip (x) paths:
        # stack along the sublane axis, matmul once, split rows.
        stacked = jnp.concatenate([_leaky(x), x], axis=0)            # [2*tm, K]
        a = mm(stacked, ma_ref) + ba                                  # [2*tm, N]
        a_main, a_skip = a[:tm], a[tm:]
        z_main = mm(_leaky(a_main), mb_ref) + bb
        return a_skip + z_main

    x = residual_block(x, ma0_ref, ba0_ref[...], mb0_ref, bb0_ref[...])
    # TODO(synk): reference self-attention block goes here but is multiplied by
    # torch.zeros(1, 1) in the original module -> exact zero contribution, skipped.
    x = residual_block(x, ma1_ref, ba1_ref[...], mb1_ref, bb1_ref[...])

    # BatchNorm2d (training-mode batch statistics over the real rows, weight=1,
    # bias=0) + leaky.  mean / E[x^2] reductions fused into one stacked dot
    # against a small channel-reduce matrix; f32 throughout, var clamped >= 0.
    w_spatial = red_ref.shape[0] // red_ref.shape[1]
    inv_count = 1.0 / float(rows_valid * w_spatial)
    row_ids = jax.lax.broadcasted_iota(jnp.int32, x.shape, 0)
    mask = (row_ids < rows_valid).astype(f32)                         # zero padded rows
    xm = x * mask
    sums = jnp.concatenate([jnp.sum(xm, axis=0, keepdims=True),
                            jnp.sum(xm * xm, axis=0, keepdims=True)], axis=0)  # [2, W*C]
    stats = jnp.dot(sums, red_ref[...], preferred_element_type=f32) * inv_count  # [2, C]
    mean = stats[0:1]                                                 # [1, C]
    var = jnp.maximum(stats[1:2] - mean * mean, 0.0)
    rstd = jax.lax.rsqrt(var + BN_EPS)
    scale_shift = jnp.concatenate([rstd, -mean * rstd], axis=0)       # [2, C]
    rep = jnp.dot(scale_shift, rep_ref[...], preferred_element_type=f32)  # [2, W*C]
    y = _leaky(x * rep[0:1] + rep[1:2])

    # final snconv 1x1 (C -> num_classes) + tanh; columns channel-major,
    # zero-padded to 128 lanes for an unmasked store.
    o_ref[...] = jnp.tanh(mm(y, mf_ref) + bf_ref[...])


def _full_spec(shape):
    return pl.BlockSpec(shape, lambda i: (0, 0))


def generator_forward(operands, z_in):
    b = z_in.shape[0]
    rows = max(8, -(-b // 8) * 8)          # pad batch to a sublane multiple
    z_pad = jnp.pad(z_in.astype(jnp.float32), ((0, rows - b), (0, 0)))

    args = (z_pad,
            operands["lin_w"], operands["lin_b"],
            operands["ma0"], operands["ba0"], operands["mb0"], operands["bb0"],
            operands["ma1"], operands["ba1"], operands["mb1"], operands["bb1"],
            operands["red"], operands["rep"], operands["mf"], operands["bf"])

    # TODO(synk): a batch-chunked grid (and v7x dual-core "parallel" semantics)
    # would change BatchNorm's whole-batch statistics to per-chunk statistics,
    # so the batch is kept in one grid step; weights are already amortized over
    # the full batch within this single launch.
    out = pl.pallas_call(
        functools.partial(generator_kernel, rows_valid=b),
        out_shape=jax.ShapeDtypeStruct((rows, OUT_COLS_PAD), jnp.float32),
        grid=(1,),
        in_specs=[_full_spec(a.shape) for a in args],
        out_specs=_full_spec((rows, OUT_COLS_PAD)),
        compiler_params=pltpu.CompilerParams(dimension_semantics=("arbitrary",)),
    )(*args)

    # columns are channel-major (c*W + w): slice off padding, reshape to NCHW.
    return out[:b, :OUT_COLS].reshape(b, NUM_CLASSES, C_H, W_FINAL)


# ----------------------------------------------------------------------------
# Pure-JAX reference (mirrors the PyTorch forward, f32 HIGHEST precision)
# ----------------------------------------------------------------------------
def _reference_forward(params, z_in):
    hi = jax.lax.Precision.HIGHEST

    def leaky(v):
        return jnp.where(v >= 0, v, LEAKY_SLOPE * v)

    def reflection_pad(x):
        l, r, t, bb = PADDING
        return jnp.pad(x, ((0, 0), (0, 0), (t, bb), (l, r)), mode="reflect")

    def upsample(x, sh, sw):
        return jnp.repeat(jnp.repeat(x, sh, axis=2), sw, axis=3)

    def conv_valid(x, w, b):
        dn = jax.lax.conv_dimension_numbers(x.shape, w.shape, ("NCHW", "OIHW", "NCHW"))
        y = jax.lax.conv_general_dilated(x, jnp.asarray(w), (1, 1), "VALID",
                                         dimension_numbers=dn, precision=hi)
        return y + jnp.asarray(b).reshape(1, -1, 1, 1)

    bsz = z_in.shape[0]
    z = jnp.dot(z_in, jnp.asarray(params["lin_w"]).T, precision=hi) + jnp.asarray(params["lin_b"])
    z = z.reshape(bsz, HIDDEN0, C_H, C_W)
    for lid in range(len(STRIDES)):
        sh, sw = STRIDES[lid]
        w1, b1 = params[f"conv1_{lid}_w"], params[f"conv1_{lid}_b"]
        w2, b2 = params[f"conv2_{lid}_w"], params[f"conv2_{lid}_b"]
        z0 = z
        z = leaky(z)
        z = conv_valid(reflection_pad(upsample(z, sh, sw)), w1, b1)
        z = leaky(z)
        z = conv_valid(reflection_pad(z), w2, b2)
        z0 = conv_valid(reflection_pad(upsample(z0, sh, sw)), w1, b1)
        z = z0 + z
        # attention block is multiplied by torch.zeros(1,1) -> skipped
    mean = jnp.mean(z, axis=(0, 2, 3), keepdims=True)
    var = jnp.mean((z - mean) ** 2, axis=(0, 2, 3), keepdims=True)
    z = leaky((z - mean) * jax.lax.rsqrt(var + BN_EPS))
    z = conv_valid(z, params["final_w"], params["final_b"])
    return jnp.tanh(z)


# ----------------------------------------------------------------------------
if __name__ == "__main__":
    key = jax.random.PRNGKey(0)
    pkey, zkey = jax.random.split(key)
    params = build_params(pkey)
    operands = build_kernel_operands(params)
    z_in = jax.random.normal(zkey, (BATCH, CONFIG["z_dim"]), jnp.float32)

    fwd = jax.jit(generator_forward)
    out = jax.block_until_ready(fwd(operands, z_in))

    assert out.shape == (BATCH, NUM_CLASSES, C_H, D_MODEL), out.shape
    assert bool(jnp.all(jnp.isfinite(out)))

    ref = jax.block_until_ready(_reference_forward(params, z_in))
    # tolerance accommodates bf16 matmul inputs (f32 accumulation) in the kernel
    # vs the f32 HIGHEST-precision reference.
    np.testing.assert_allclose(np.asarray(out), np.asarray(ref), rtol=5e-2, atol=5e-2)

    print("KERNEL_OK")
</pallas_src>

<mosaic_0001>
module attributes {stable_mosaic.version = 11 : i64} {
  func.func @generator_kernel(%arg0: i32, %arg1: memref<8x8xf32, #tpu.memory_space<vmem>>, %arg2: memref<8x128xbf16, #tpu.memory_space<vmem>>, %arg3: memref<1x128xf32, #tpu.memory_space<vmem>>, %arg4: memref<128x256xbf16, #tpu.memory_space<vmem>>, %arg5: memref<1x256xf32, #tpu.memory_space<vmem>>, %arg6: memref<256x256xbf16, #tpu.memory_space<vmem>>, %arg7: memref<1x256xf32, #tpu.memory_space<vmem>>, %arg8: memref<256x256xbf16, #tpu.memory_space<vmem>>, %arg9: memref<1x256xf32, #tpu.memory_space<vmem>>, %arg10: memref<256x256xbf16, #tpu.memory_space<vmem>>, %arg11: memref<1x256xf32, #tpu.memory_space<vmem>>, %arg12: memref<256x16xf32, #tpu.memory_space<vmem>>, %arg13: memref<16x256xf32, #tpu.memory_space<vmem>>, %arg14: memref<256x128xbf16, #tpu.memory_space<vmem>>, %arg15: memref<1x128xf32, #tpu.memory_space<vmem>>, %arg16: memref<8x128xf32, #tpu.memory_space<vmem>>) attributes {dimension_semantics = [#tpu.dimension_semantics<arbitrary>], iteration_bounds = array<i64: 1>, scalar_prefetch = 0 : i64, scratch_operands = 0 : i64, tpu.core_type = #tpu.core_type<tc>, window_params = [{pipeline_mode = #tpu.pipeline_mode<synchronous>, transform_indices = @transform_0, window_bounds = array<i64: 8, 8>}, {pipeline_mode = #tpu.pipeline_mode<synchronous>, transform_indices = @transform_1, window_bounds = array<i64: 8, 128>}, {pipeline_mode = #tpu.pipeline_mode<synchronous>, transform_indices = @transform_2, window_bounds = array<i64: 1, 128>}, {pipeline_mode = #tpu.pipeline_mode<synchronous>, transform_indices = @transform_3, window_bounds = array<i64: 128, 256>}, {pipeline_mode = #tpu.pipeline_mode<synchronous>, transform_indices = @transform_4, window_bounds = array<i64: 1, 256>}, {pipeline_mode = #tpu.pipeline_mode<synchronous>, transform_indices = @transform_5, window_bounds = array<i64: 256, 256>}, {pipeline_mode = #tpu.pipeline_mode<synchronous>, transform_indices = @transform_6, window_bounds = array<i64: 1, 256>}, {pipeline_mode = #tpu.pipeline_mode<synchronous>, transform_indices = @transform_7, window_bounds = array<i64: 256, 256>}, {pipeline_mode = #tpu.pipeline_mode<synchronous>, transform_indices = @transform_8, window_bounds = array<i64: 1, 256>}, {pipeline_mode = #tpu.pipeline_mode<synchronous>, transform_indices = @transform_9, window_bounds = array<i64: 256, 256>}, {pipeline_mode = #tpu.pipeline_mode<synchronous>, transform_indices = @transform_10, window_bounds = array<i64: 1, 256>}, {pipeline_mode = #tpu.pipeline_mode<synchronous>, transform_indices = @transform_11, window_bounds = array<i64: 256, 16>}, {pipeline_mode = #tpu.pipeline_mode<synchronous>, transform_indices = @transform_12, window_bounds = array<i64: 16, 256>}, {pipeline_mode = #tpu.pipeline_mode<synchronous>, transform_indices = @transform_13, window_bounds = array<i64: 256, 128>}, {pipeline_mode = #tpu.pipeline_mode<synchronous>, transform_indices = @transform_14, window_bounds = array<i64: 1, 128>}, {pipeline_mode = #tpu.pipeline_mode<synchronous>, transform_indices = @transform_15, window_bounds = array<i64: 8, 128>}]} {
    %c0 = arith.constant 0 : index
    %c0_0 = arith.constant 0 : index
    %0 = vector.load %arg1[%c0, %c0_0] : memref<8x8xf32, #tpu.memory_space<vmem>>, vector<8x8xf32>
    %1 = arith.truncf %0 : vector<8x8xf32> to vector<8x8xbf16>
    %c0_1 = arith.constant 0 : index
    %c0_2 = arith.constant 0 : index
    %2 = vector.load %arg2[%c0_1, %c0_2] : memref<8x128xbf16, #tpu.memory_space<vmem>>, vector<8x128xbf16>
    %cst = arith.constant dense<0.000000e+00> : vector<8x128xf32>
    %3 = tpu.matmul %1, %2, %cst {dimension_numbers = #tpu.dot_dimension_numbers<[1], [0], [0], [1], [0, 0, 1, 1], [], []>} : vector<8x8xbf16>, vector<8x128xbf16>, vector<8x128xf32> -> vector<8x128xf32>
    %c0_3 = arith.constant 0 : index
    %c0_4 = arith.constant 0 : index
    %4 = vector.load %arg3[%c0_3, %c0_4] : memref<1x128xf32, #tpu.memory_space<vmem>>, vector<1x128xf32>
    %5 = vector.broadcast %4 : vector<1x128xf32> to vector<8x128xf32>
    %6 = arith.addf %3, %5 : vector<8x128xf32>
    %c0_5 = arith.constant 0 : index
    %c0_6 = arith.constant 0 : index
    %7 = vector.load %arg5[%c0_5, %c0_6] : memref<1x256xf32, #tpu.memory_space<vmem>>, vector<1x256xf32>
    %c0_7 = arith.constant 0 : index
    %c0_8 = arith.constant 0 : index
    %8 = vector.load %arg7[%c0_7, %c0_8] : memref<1x256xf32, #tpu.memory_space<vmem>>, vector<1x256xf32>
    %cst_9 = arith.constant 0.000000e+00 : f32
    %9 = vector.broadcast %cst_9 : f32 to vector<8x128xf32>
    %10 = arith.cmpf oge, %6, %9 : vector<8x128xf32>
    %cst_10 = arith.constant 0.00999999977 : f32
    %11 = vector.broadcast %cst_10 : f32 to vector<8x128xf32>
    %12 = arith.mulf %11, %6 : vector<8x128xf32>
    %13 = arith.select %10, %6, %12 : vector<8x128xi1>, vector<8x128xf32>
    %14 = tpu.concatenate %13, %6 in 0 : vector<8x128xf32>, vector<8x128xf32> -> vector<16x128xf32>
    %15 = arith.truncf %14 : vector<16x128xf32> to vector<16x128xbf16>
    %c0_11 = arith.constant 0 : index
    %c0_12 = arith.constant 0 : index
    %16 = vector.load %arg4[%c0_11, %c0_12] : memref<128x256xbf16, #tpu.memory_space<vmem>>, vector<128x256xbf16>
    %cst_13 = arith.constant dense<0.000000e+00> : vector<16x256xf32>
    %17 = tpu.matmul %15, %16, %cst_13 {dimension_numbers = #tpu.dot_dimension_numbers<[1], [0], [0], [1], [0, 0, 1, 1], [], []>} : vector<16x128xbf16>, vector<128x256xbf16>, vector<16x256xf32> -> vector<16x256xf32>
    %18 = vector.broadcast %7 : vector<1x256xf32> to vector<16x256xf32>
    %19 = arith.addf %17, %18 : vector<16x256xf32>
    %20 = vector.extract_strided_slice %19 {offsets = [0, 0], sizes = [8, 256], strides = [1, 1]} : vector<16x256xf32> to vector<8x256xf32>
    %21 = vector.extract_strided_slice %19 {offsets = [8, 0], sizes = [8, 256], strides = [1, 1]} : vector<16x256xf32> to vector<8x256xf32>
    %cst_14 = arith.constant 0.000000e+00 : f32
    %22 = vector.broadcast %cst_14 : f32 to vector<8x256xf32>
    %23 = arith.cmpf oge, %20, %22 : vector<8x256xf32>
    %cst_15 = arith.constant 0.00999999977 : f32
    %24 = vector.broadcast %cst_15 : f32 to vector<8x256xf32>
    %25 = arith.mulf %24, %20 : vector<8x256xf32>
    %26 = arith.select %23, %20, %25 : vector<8x256xi1>, vector<8x256xf32>
    %27 = arith.truncf %26 : vector<8x256xf32> to vector<8x256xbf16>
    %c0_16 = arith.constant 0 : index
    %c0_17 = arith.constant 0 : index
    %28 = vector.load %arg6[%c0_16, %c0_17] : memref<256x256xbf16, #tpu.memory_space<vmem>>, vector<256x256xbf16>
    %cst_18 = arith.constant dense<0.000000e+00> : vector<8x256xf32>
    %29 = tpu.matmul %27, %28, %cst_18 {dimension_numbers = #tpu.dot_dimension_numbers<[1], [0], [0], [1], [0, 0, 1, 1], [], []>} : vector<8x256xbf16>, vector<256x256xbf16>, vector<8x256xf32> -> vector<8x256xf32>
    %30 = vector.broadcast %8 : vector<1x256xf32> to vector<8x256xf32>
    %31 = arith.addf %29, %30 : vector<8x256xf32>
    %32 = arith.addf %21, %31 : vector<8x256xf32>
    %c0_19 = arith.constant 0 : index
    %c0_20 = arith.constant 0 : index
    %33 = vector.load %arg9[%c0_19, %c0_20] : memref<1x256xf32, #tpu.memory_space<vmem>>, vector<1x256xf32>
    %c0_21 = arith.constant 0 : index
    %c0_22 = arith.constant 0 : index
    %34 = vector.load %arg11[%c0_21, %c0_22] : memref<1x256xf32, #tpu.memory_space<vmem>>, vector<1x256xf32>
    %cst_23 = arith.constant 0.000000e+00 : f32
    %35 = vector.broadcast %cst_23 : f32 to vector<8x256xf32>
    %36 = arith.cmpf oge, %32, %35 : vector<8x256xf32>
    %cst_24 = arith.constant 0.00999999977 : f32
    %37 = vector.broadcast %cst_24 : f32 to vector<8x256xf32>
    %38 = arith.mulf %37, %32 : vector<8x256xf32>
    %39 = arith.select %36, %32, %38 : vector<8x256xi1>, vector<8x256xf32>
    %40 = tpu.concatenate %39, %32 in 0 : vector<8x256xf32>, vector<8x256xf32> -> vector<16x256xf32>
    %41 = arith.truncf %40 : vector<16x256xf32> to vector<16x256xbf16>
    %c0_25 = arith.constant 0 : index
    %c0_26 = arith.constant 0 : index
    %42 = vector.load %arg8[%c0_25, %c0_26] : memref<256x256xbf16, #tpu.memory_space<vmem>>, vector<256x256xbf16>
    %cst_27 = arith.constant dense<0.000000e+00> : vector<16x256xf32>
    %43 = tpu.matmul %41, %42, %cst_27 {dimension_numbers = #tpu.dot_dimension_numbers<[1], [0], [0], [1], [0, 0, 1, 1], [], []>} : vector<16x256xbf16>, vector<256x256xbf16>, vector<16x256xf32> -> vector<16x256xf32>
    %44 = vector.broadcast %33 : vector<1x256xf32> to vector<16x256xf32>
    %45 = arith.addf %43, %44 : vector<16x256xf32>
    %46 = vector.extract_strided_slice %45 {offsets = [0, 0], sizes = [8, 256], strides = [1, 1]} : vector<16x256xf32> to vector<8x256xf32>
    %47 = vector.extract_strided_slice %45 {offsets = [8, 0], sizes = [8, 256], strides = [1, 1]} : vector<16x256xf32> to vector<8x256xf32>
    %cst_28 = arith.constant 0.000000e+00 : f32
    %48 = vector.broadcast %cst_28 : f32 to vector<8x256xf32>
    %49 = arith.cmpf oge, %46, %48 : vector<8x256xf32>
    %cst_29 = arith.constant 0.00999999977 : f32
    %50 = vector.broadcast %cst_29 : f32 to vector<8x256xf32>
    %51 = arith.mulf %50, %46 : vector<8x256xf32>
    %52 = arith.select %49, %46, %51 : vector<8x256xi1>, vector<8x256xf32>
    %53 = arith.truncf %52 : vector<8x256xf32> to vector<8x256xbf16>
    %c0_30 = arith.constant 0 : index
    %c0_31 = arith.constant 0 : index
    %54 = vector.load %arg10[%c0_30, %c0_31] : memref<256x256xbf16, #tpu.memory_space<vmem>>, vector<256x256xbf16>
    %cst_32 = arith.constant dense<0.000000e+00> : vector<8x256xf32>
    %55 = tpu.matmul %53, %54, %cst_32 {dimension_numbers = #tpu.dot_dimension_numbers<[1], [0], [0], [1], [0, 0, 1, 1], [], []>} : vector<8x256xbf16>, vector<256x256xbf16>, vector<8x256xf32> -> vector<8x256xf32>
    %56 = vector.broadcast %34 : vector<1x256xf32> to vector<8x256xf32>
    %57 = arith.addf %55, %56 : vector<8x256xf32>
    %58 = arith.addf %47, %57 : vector<8x256xf32>
    %59 = tpu.iota {dimensions = array<i32: 0>} : vector<8x256xi32>
    %c2_i32 = arith.constant 2 : i32
    %60 = vector.broadcast %c2_i32 : i32 to vector<8x256xi32>
    %61 = arith.cmpi slt, %59, %60 : vector<8x256xi32>
    %62 = arith.extui %61 : vector<8x256xi1> to vector<8x256xi32>
    %63 = arith.sitofp %62 : vector<8x256xi32> to vector<8x256xf32>
    %64 = arith.mulf %58, %63 : vector<8x256xf32>
    %cst_33 = arith.constant dense<0.000000e+00> : vector<256xf32>
    %65 = vector.multi_reduction <add>, %64, %cst_33 [0] : vector<8x256xf32> to vector<256xf32>
    %66 = vector.shape_cast %65 : vector<256xf32> to vector<1x256xf32>
    %67 = arith.mulf %64, %64 : vector<8x256xf32>
    %cst_34 = arith.constant dense<0.000000e+00> : vector<256xf32>
    %68 = vector.multi_reduction <add>, %67, %cst_34 [0] : vector<8x256xf32> to vector<256xf32>
    %69 = vector.shape_cast %68 : vector<256xf32> to vector<1x256xf32>
    %70 = tpu.concatenate %66, %69 in 0 : vector<1x256xf32>, vector<1x256xf32> -> vector<2x256xf32>
    %c0_35 = arith.constant 0 : index
    %c0_36 = arith.constant 0 : index
    %71 = vector.load %arg12[%c0_35, %c0_36] : memref<256x16xf32, #tpu.memory_space<vmem>>, vector<256x16xf32>
    %cst_37 = arith.constant dense<0.000000e+00> : vector<2x16xf32>
    %72 = tpu.matmul %70, %71, %cst_37 {dimension_numbers = #tpu.dot_dimension_numbers<[1], [0], [0], [1], [0, 0, 1, 1], [], []>} : vector<2x256xf32>, vector<256x16xf32>, vector<2x16xf32> -> vector<2x16xf32>
    %cst_38 = arith.constant 3.125000e-02 : f32
    %73 = vector.broadcast %cst_38 : f32 to vector<2x16xf32>
    %74 = arith.mulf %72, %73 : vector<2x16xf32>
    %75 = vector.extract_strided_slice %74 {offsets = [0, 0], sizes = [1, 16], strides = [1, 1]} : vector<2x16xf32> to vector<1x16xf32>
    %76 = vector.extract_strided_slice %74 {offsets = [1, 0], sizes = [1, 16], strides = [1, 1]} : vector<2x16xf32> to vector<1x16xf32>
    %77 = arith.mulf %75, %75 : vector<1x16xf32>
    %78 = arith.subf %76, %77 : vector<1x16xf32>
    %cst_39 = arith.constant 0.000000e+00 : f32
    %79 = vector.broadcast %cst_39 : f32 to vector<1x16xf32>
    %80 = arith.maximumf %78, %79 : vector<1x16xf32>
    %cst_40 = arith.constant 9.99999974E-6 : f32
    %81 = vector.broadcast %cst_40 : f32 to vector<1x16xf32>
    %82 = arith.addf %80, %81 : vector<1x16xf32>
    %83 = math.rsqrt %82 : vector<1x16xf32>
    %cst_41 = arith.constant 0.000000e+00 : f32
    %84 = vector.broadcast %cst_41 : f32 to vector<1x16xf32>
    %85 = arith.subf %84, %75 : vector<1x16xf32>
    %86 = arith.mulf %85, %83 : vector<1x16xf32>
    %87 = tpu.concatenate %83, %86 in 0 : vector<1x16xf32>, vector<1x16xf32> -> vector<2x16xf32>
    %c0_42 = arith.constant 0 : index
    %c0_43 = arith.constant 0 : index
    %88 = vector.load %arg13[%c0_42, %c0_43] : memref<16x256xf32, #tpu.memory_space<vmem>>, vector<16x256xf32>
    %cst_44 = arith.constant dense<0.000000e+00> : vector<2x256xf32>
    %89 = tpu.matmul %87, %88, %cst_44 {dimension_numbers = #tpu.dot_dimension_numbers<[1], [0], [0], [1], [0, 0, 1, 1], [], []>} : vector<2x16xf32>, vector<16x256xf32>, vector<2x256xf32> -> vector<2x256xf32>
    %90 = vector.extract_strided_slice %89 {offsets = [0, 0], sizes = [1, 256], strides = [1, 1]} : vector<2x256xf32> to vector<1x256xf32>
    %91 = vector.broadcast %90 : vector<1x256xf32> to vector<8x256xf32>
    %92 = arith.mulf %58, %91 : vector<8x256xf32>
    %93 = vector.extract_strided_slice %89 {offsets = [1, 0], sizes = [1, 256], strides = [1, 1]} : vector<2x256xf32> to vector<1x256xf32>
    %94 = vector.broadcast %93 : vector<1x256xf32> to vector<8x256xf32>
    %95 = arith.addf %92, %94 : vector<8x256xf32>
    %cst_45 = arith.constant 0.000000e+00 : f32
    %96 = vector.broadcast %cst_45 : f32 to vector<8x256xf32>
    %97 = arith.cmpf oge, %95, %96 : vector<8x256xf32>
    %cst_46 = arith.constant 0.00999999977 : f32
    %98 = vector.broadcast %cst_46 : f32 to vector<8x256xf32>
    %99 = arith.mulf %98, %95 : vector<8x256xf32>
    %100 = arith.select %97, %95, %99 : vector<8x256xi1>, vector<8x256xf32>
    %101 = arith.truncf %100 : vector<8x256xf32> to vector<8x256xbf16>
    %c0_47 = arith.constant 0 : index
    %c0_48 = arith.constant 0 : index
    %102 = vector.load %arg14[%c0_47, %c0_48] : memref<256x128xbf16, #tpu.memory_space<vmem>>, vector<256x128xbf16>
    %cst_49 = arith.constant dense<0.000000e+00> : vector<8x128xf32>
    %103 = tpu.matmul %101, %102, %cst_49 {dimension_numbers = #tpu.dot_dimension_numbers<[1], [0], [0], [1], [0, 0, 1, 1], [], []>} : vector<8x256xbf16>, vector<256x128xbf16>, vector<8x128xf32> -> vector<8x128xf32>
    %c0_50 = arith.constant 0 : index
    %c0_51 = arith.constant 0 : index
    %104 = vector.load %arg15[%c0_50, %c0_51] : memref<1x128xf32, #tpu.memory_space<vmem>>, vector<1x128xf32>
    %105 = vector.broadcast %104 : vector<1x128xf32> to vector<8x128xf32>
    %106 = arith.addf %103, %105 : vector<8x128xf32>
    %107 = math.tanh %106 : vector<8x128xf32>
    %c0_52 = arith.constant 0 : index
    %c0_53 = arith.constant 0 : index
    %108 = vector.load %arg16[%c0_52, %c0_53] : memref<8x128xf32, #tpu.memory_space<vmem>>, vector<8x128xf32>
    tpu.vector_store %arg16[%c0_52, %c0_53], %107 {strides = array<i32>} : memref<8x128xf32, #tpu.memory_space<vmem>>, vector<8x128xf32>,
    return
  }
  func.func @transform_0(%arg0: i32) -> (i32, i32) {
    %c0_i32 = arith.constant 0 : i32
    %c0_i32_0 = arith.constant 0 : i32
    %c0_i32_1 = arith.constant 0 : i32
    return %c0_i32, %c0_i32_0 : i32, i32
  }
  func.func @transform_1(%arg0: i32) -> (i32, i32) {
    %c0_i32 = arith.constant 0 : i32
    %c0_i32_0 = arith.constant 0 : i32
    %c0_i32_1 = arith.constant 0 : i32
    return %c0_i32, %c0_i32_0 : i32, i32
  }
  func.func @transform_2(%arg0: i32) -> (i32, i32) {
    %c0_i32 = arith.constant 0 : i32
    %c0_i32_0 = arith.constant 0 : i32
    %c0_i32_1 = arith.constant 0 : i32
    return %c0_i32, %c0_i32_0 : i32, i32
  }
  func.func @transform_3(%arg0: i32) -> (i32, i32) {
    %c0_i32 = arith.constant 0 : i32
    %c0_i32_0 = arith.constant 0 : i32
    %c0_i32_1 = arith.constant 0 : i32
    return %c0_i32, %c0_i32_0 : i32, i32
  }
  func.func @transform_4(%arg0: i32) -> (i32, i32) {
    %c0_i32 = arith.constant 0 : i32
    %c0_i32_0 = arith.constant 0 : i32
    %c0_i32_1 = arith.constant 0 : i32
    return %c0_i32, %c0_i32_0 : i32, i32
  }
  func.func @transform_5(%arg0: i32) -> (i32, i32) {
    %c0_i32 = arith.constant 0 : i32
    %c0_i32_0 = arith.constant 0 : i32
    %c0_i32_1 = arith.constant 0 : i32
    return %c0_i32, %c0_i32_0 : i32, i32
  }
  func.func @transform_6(%arg0: i32) -> (i32, i32) {
    %c0_i32 = arith.constant 0 : i32
    %c0_i32_0 = arith.constant 0 : i32
    %c0_i32_1 = arith.constant 0 : i32
    return %c0_i32, %c0_i32_0 : i32, i32
  }
  func.func @transform_7(%arg0: i32) -> (i32, i32) {
    %c0_i32 = arith.constant 0 : i32
    %c0_i32_0 = arith.constant 0 : i32
    %c0_i32_1 = arith.constant 0 : i32
    return %c0_i32, %c0_i32_0 : i32, i32
  }
  func.func @transform_8(%arg0: i32) -> (i32, i32) {
    %c0_i32 = arith.constant 0 : i32
    %c0_i32_0 = arith.constant 0 : i32
    %c0_i32_1 = arith.constant 0 : i32
    return %c0_i32, %c0_i32_0 : i32, i32
  }
  func.func @transform_9(%arg0: i32) -> (i32, i32) {
    %c0_i32 = arith.constant 0 : i32
    %c0_i32_0 = arith.constant 0 : i32
    %c0_i32_1 = arith.constant 0 : i32
    return %c0_i32, %c0_i32_0 : i32, i32
  }
  func.func @transform_10(%arg0: i32) -> (i32, i32) {
    %c0_i32 = arith.constant 0 : i32
    %c0_i32_0 = arith.constant 0 : i32
    %c0_i32_1 = arith.constant 0 : i32
    return %c0_i32, %c0_i32_0 : i32, i32
  }
  func.func @transform_11(%arg0: i32) -> (i32, i32) {
    %c0_i32 = arith.constant 0 : i32
    %c0_i32_0 = arith.constant 0 : i32
    %c0_i32_1 = arith.constant 0 : i32
    return %c0_i32, %c0_i32_0 : i32, i32
  }
  func.func @transform_12(%arg0: i32) -> (i32, i32) {
    %c0_i32 = arith.constant 0 : i32
    %c0_i32_0 = arith.constant 0 : i32
    %c0_i32_1 = arith.constant 0 : i32
    return %c0_i32, %c0_i32_0 : i32, i32
  }
  func.func @transform_13(%arg0: i32) -> (i32, i32) {
    %c0_i32 = arith.constant 0 : i32
    %c0_i32_0 = arith.constant 0 : i32
    %c0_i32_1 = arith.constant 0 : i32
    return %c0_i32, %c0_i32_0 : i32, i32
  }
  func.func @transform_14(%arg0: i32) -> (i32, i32) {
    %c0_i32 = arith.constant 0 : i32
    %c0_i32_0 = arith.constant 0 : i32
    %c0_i32_1 = arith.constant 0 : i32
    return %c0_i32, %c0_i32_0 : i32, i32
  }
  func.func @transform_15(%arg0: i32) -> (i32, i32) {
    %c0_i32 = arith.constant 0 : i32
    %c0_i32_0 = arith.constant 0 : i32
    %c0_i32_1 = arith.constant 0 : i32
    return %c0_i32, %c0_i32_0 : i32, i32
  }
}

</mosaic_0001>

<llo_original>
// kernel: generator_forward.1
$region0: #{generator_forward.1}
  #allocation0 [shape = 'u32[]', space=smem, size = 0x4, offset = 0x4, fixed_abs, tag = 'smem constant byte address 0x4 - core index']
  #allocation1 [shape = 'u32[144,128]{1,0:T(1,128)}', space=vmem, size = 0x12000, scoped, tag = 'internal scratch']
  %s0 = inlined_call_operand.vmem [shape: f32[8,8], index: 0, kind: input, shape index: {}]
  %s1 = inlined_call_operand.vmem [shape: bf16[8,128], index: 1, kind: input, shape index: {}]
  %s2 = inlined_call_operand.vmem [shape: f32[1,128], index: 2, kind: input, shape index: {}]
  %s3 = inlined_call_operand.hbm [shape: bf16[128,256], index: 3, kind: input, shape index: {}]
  %s4 = inlined_call_operand.vmem [shape: f32[1,256], index: 4, kind: input, shape index: {}]
  %s5 = inlined_call_operand.vmem [shape: bf16[256,256], index: 5, kind: input, shape index: {}]
  %s6 = inlined_call_operand.vmem [shape: f32[1,256], index: 6, kind: input, shape index: {}]
  %s7 = inlined_call_operand.hbm [shape: bf16[256,256], index: 7, kind: input, shape index: {}]
  %s8 = inlined_call_operand.vmem [shape: f32[1,256], index: 8, kind: input, shape index: {}]
  %s9 = inlined_call_operand.hbm [shape: bf16[256,256], index: 9, kind: input, shape index: {}]
  %s10 = inlined_call_operand.vmem [shape: f32[1,256], index: 10, kind: input, shape index: {}]
  %s11 = inlined_call_operand.vmem [shape: f32[256,16], index: 11, kind: input, shape index: {}]
  %s12 = inlined_call_operand.vmem [shape: f32[16,256], index: 12, kind: input, shape index: {}]
  %s13 = inlined_call_operand.hbm [shape: bf16[256,128], index: 13, kind: input, shape index: {}]
  %s14 = inlined_call_operand.vmem [shape: f32[1,128], index: 14, kind: input, shape index: {}]
  %s15 = inlined_call_operand.vmem [shape: f32[8,128], index: 15, kind: output, shape index: {}]
  %s16 = sld [smem:[#allocation0]]
  $region86: #{generator_forward.1} parent=0
    _
  %s18 = ssub.s32 1, %s16
  %s19 = scalar_select 0, %s18, %s16
  $region1: #{generator_forward.1} parent=0
    #allocation2 [shape = 'u8[65536]{0}', space=vmem, size = 0x10000, scoped, tag = 'input window, operand 3, single buffered']
    #allocation3 [shape = 's32[1]{0}', space=sflag, size = 0x4, scoped, tag = 'scoped memory for generator_forward.1']
    #allocation4 [shape = 'u8[131072]{0}', space=vmem, size = 0x20000, scoped, tag = 'input window, operand 7, single buffered']
    #allocation5 [shape = 's32[1]{0}', space=sflag, size = 0x4, scoped, tag = 'scoped memory for generator_forward.1']
    #allocation6 [shape = 'u8[131072]{0}', space=vmem, size = 0x20000, scoped, tag = 'input window, operand 9, single buffered']
    #allocation7 [shape = 'u8[65536]{0}', space=vmem, size = 0x10000, scoped, tag = 'input window, operand 13, single buffered']
    #allocation8 [shape = 's32[1]{0}', space=sflag, size = 0x4, scoped, tag = 'scoped memory for generator_forward.1']
    %20 = vsyncpa [#allocation3], 0
    %21 = vsyncpa [#allocation5], 0
    %22 = vsyncpa [#allocation8], 0
    // Predicated region
    $region2: #{generator_forward.1} parent=1 // pred_check
      _
    $region3: #{generator_forward.1} parent=1 // pred_check_branch
      %24 = sbr.rel (0) target = $region5
    $region4: #{generator_forward.1} parent=1 // pred_region
      _
    $region5: #{generator_forward.1} parent=1 // pred_fallthru
      _
    // Predicated region
    $region6: #{generator_forward.1} parent=1 // pred_check
      _
    $region7: #{generator_forward.1} parent=1 // pred_check_branch
      %26 = sbr.rel (0) target = $region9
    $region8: #{generator_forward.1} parent=1 // pred_region
      _
    $region9: #{generator_forward.1} parent=1 // pred_fallthru
      _
    // Predicated region
    $region10: #{generator_forward.1} parent=1 // pred_check
      _
    $region11: #{generator_forward.1} parent=1 // pred_check_branch
      %28 = sbr.rel (0) target = $region13
    $region12: #{generator_forward.1} parent=1 // pred_region
      _
    $region13: #{generator_forward.1} parent=1 // pred_fallthru
      _
    // Predicated region
    $region14: #{generator_forward.1} parent=1 // pred_check
      _
    $region15: #{generator_forward.1} parent=1 // pred_check_branch
      %30 = sbr.rel (0) target = $region17
    $region16: #{generator_forward.1} parent=1 // pred_region
      %s32 = ssub.s32 2048, 2048
      %33 = vsyncadd [#allocation3], %s32
      %s34 = sshll.u32 [#allocation2], 4
      %s35 = int_to_ptr.vmem [resolvable:$true] %s34
      %40 = dma.hbm_to_vmem [thread:$0]  %s3, 2048, %s35, [#allocation3], 128, 128, 8
    $region17: #{generator_forward.1} parent=1 // pred_fallthru
      _
    // Predicated region
    $region18: #{generator_forward.1} parent=1 // pred_check
      _
    $region19: #{generator_forward.1} parent=1 // pred_check_branch
      %42 = sbr.rel (0) target = $region21
    $region20: #{generator_forward.1} parent=1 // pred_region
      _
    $region21: #{generator_forward.1} parent=1 // pred_fallthru
      _
    // Predicated region
    $region22: #{generator_forward.1} parent=1 // pred_check
      _
    $region23: #{generator_forward.1} parent=1 // pred_check_branch
      %44 = sbr.rel (0) target = $region25
    $region24: #{generator_forward.1} parent=1 // pred_region
      _
    $region25: #{generator_forward.1} parent=1 // pred_fallthru
      _
    // Predicated region
    $region26: #{generator_forward.1} parent=1 // pred_check
      _
    $region27: #{generator_forward.1} parent=1 // pred_check_branch
      %46 = sbr.rel (0) target = $region29
    $region28: #{generator_forward.1} parent=1 // pred_region
      _
    $region29: #{generator_forward.1} parent=1 // pred_fallthru
      _
    // Predicated region
    $region30: #{generator_forward.1} parent=1 // pred_check
      _
    $region31: #{generator_forward.1} parent=1 // pred_check_branch
      %48 = sbr.rel (0) target = $region33
    $region32: #{generator_forward.1} parent=1 // pred_region
      %s50 = ssub.s32 4096, 4096
      %51 = vsyncadd [#allocation5], %s50
      %s52 = sshll.u32 [#allocation4], 4
      %s53 = int_to_ptr.vmem [resolvable:$true] %s52
      %58 = dma.hbm_to_vmem [thread:$0]  %s7, 4096, %s53, [#allocation5], 128, 128, 8
    $region33: #{generator_forward.1} parent=1 // pred_fallthru
      _
    // Predicated region
    $region34: #{generator_forward.1} parent=1 // pred_check
      _
    $region35: #{generator_forward.1} parent=1 // pred_check_branch
      %60 = sbr.rel (0) target = $region37
    $region36: #{generator_forward.1} parent=1 // pred_region
      _
    $region37: #{generator_forward.1} parent=1 // pred_fallthru
      _
    // Predicated region
    $region38: #{generator_forward.1} parent=1 // pred_check
      _
    $region39: #{generator_forward.1} parent=1 // pred_check_branch
      %62 = sbr.rel (0) target = $region41
    $region40: #{generator_forward.1} parent=1 // pred_region
      %s64 = ssub.s32 4096, 4096
      %65 = vsyncadd [#allocation5], %s64
      %s66 = sshll.u32 [#allocation6], 4
      %s67 = int_to_ptr.vmem [resolvable:$true] %s66
      %72 = dma.hbm_to_vmem [thread:$0]  %s9, 4096, %s67, [#allocation5], 128, 128, 8
    $region41: #{generator_forward.1} parent=1 // pred_fallthru
      _
    // Predicated region
    $region42: #{generator_forward.1} parent=1 // pred_check
      _
    $region43: #{generator_forward.1} parent=1 // pred_check_branch
      %74 = sbr.rel (0) target = $region45
    $region44: #{generator_forward.1} parent=1 // pred_region
      _
    $region45: #{generator_forward.1} parent=1 // pred_fallthru
      _
    // Predicated region
    $region46: #{generator_forward.1} parent=1 // pred_check
      _
    $region47: #{generator_forward.1} parent=1 // pred_check_branch
      %76 = sbr.rel (0) target = $region49
    $region48: #{generator_forward.1} parent=1 // pred_region
      _
    $region49: #{generator_forward.1} parent=1 // pred_fallthru
      _
    // Predicated region
    $region50: #{generator_forward.1} parent=1 // pred_check
      _
    $region51: #{generator_forward.1} parent=1 // pred_check_branch
      %78 = sbr.rel (0) target = $region53
    $region52: #{generator_forward.1} parent=1 // pred_region
      _
    $region53: #{generator_forward.1} parent=1 // pred_fallthru
      _
    // Predicated region
    $region54: #{generator_forward.1} parent=1 // pred_check
      _
    $region55: #{generator_forward.1} parent=1 // pred_check_branch
      %80 = sbr.rel (0) target = $region57
    $region56: #{generator_forward.1} parent=1 // pred_region
      %s82 = ssub.s32 2048, 2048
      %83 = vsyncadd [#allocation8], %s82
      %s84 = sshll.u32 [#allocation7], 4
      %s85 = int_to_ptr.vmem [resolvable:$true] %s84
      %90 = dma.hbm_to_vmem [thread:$0]  %s13, 2048, %s85, [#allocation8], 64, 64, 4
    $region57: #{generator_forward.1} parent=1 // pred_fallthru
      _
    // Predicated region
    $region58: #{generator_forward.1} parent=1 // pred_check
      _
    $region59: #{generator_forward.1} parent=1 // pred_check_branch
      %92 = sbr.rel (0) target = $region61
    $region60: #{generator_forward.1} parent=1 // pred_region
      _
    $region61: #{generator_forward.1} parent=1 // pred_fallthru
      _
    // Predicated region
    $region62: #{generator_forward.1} parent=1 // pred_check
      _
    $region63: #{generator_forward.1} parent=1 // pred_check_branch
      %94 = sbr.rel (0) target = $region65
    $region64: #{generator_forward.1} parent=1 // pred_region
      %95 = dma.done [#allocation3], 2048
    $region65: #{generator_forward.1} parent=1 // pred_fallthru
      _
    // Predicated region
    $region66: #{generator_forward.1} parent=1 // pred_check
      _
    $region67: #{generator_forward.1} parent=1 // pred_check_branch
      %97 = sbr.rel (0) target = $region69
    $region68: #{generator_forward.1} parent=1 // pred_region
      %98 = dma.done [#allocation5], 4096
    $region69: #{generator_forward.1} parent=1 // pred_fallthru
      _
    // Predicated region
    $region70: #{generator_forward.1} parent=1 // pred_check
      _
    $region71: #{generator_forward.1} parent=1 // pred_check_branch
      %100 = sbr.rel (0) target = $region73
    $region72: #{generator_forward.1} parent=1 // pred_region
      %101 = dma.done [#allocation5], 4096
    $region73: #{generator_forward.1} parent=1 // pred_fallthru
      _
    // Predicated region
    $region74: #{generator_forward.1} parent=1 // pred_check
      _
    $region75: #{generator_forward.1} parent=1 // pred_check_branch
      %103 = sbr.rel (0) target = $region77
    $region76: #{generator_forward.1} parent=1 // pred_region
      %104 = dma.done [#allocation8], 2048
    $region77: #{generator_forward.1} parent=1 // pred_fallthru
      _
    %v106 = vld [vmem:[%s0] sm:$0xff]
    %v107 = vpack.c.bf16 %v106, %v106
    %v108 = vld [vmem:[%s1] sm:$0xf]
    %v109 = vld [vmem:[%s2] sm:$0x1]
    %v111 = vlaneseq
    %v112 = vshrl.u32 %v111, 7
    %v113 = vsub.s32 0, %v112
    %v114 = vrot.slane %v109, %v113
    %vm116 = vcmask 64512
    %v118 = vsel %vm116, %v107, 0
    %vm120 = vcmask 1043456
    %v122 = vsel %vm120, %v108, 0
    %124 = vmatprep.subr.bf16.mxu0 0
    %125 = vmatpush1.bf16.msra.mxu0 %v122
    %126 = vmatprep.subr.bf16.mxu0 0
    %127 = vmatpush1.bf16.msra.mxu0 0
    %128 = vmatprep.subr.bf16.mxu0 0
    %129 = vmatpush1.bf16.msra.mxu0 0
    %130 = vmatprep.subr.bf16.mxu0 0
    %131 = vmatpush1.bf16.msra.mxu0 0
    %132 = vmatprep.subr.bf16.mxu0 0
    %133 = vmatpush1.bf16.msra.mxu0 0
    %134 = vmatprep.subr.bf16.mxu0 0
    %135 = vmatpush1.bf16.msra.mxu0 0
    %136 = vmatprep.subr.bf16.mxu0 0
    %137 = vmatpush1.bf16.msra.mxu0 0
    %138 = vmatprep.subr.bf16.mxu0 0
    %139 = vmatpush1.bf16.msra.mxu0 0
    %140 = vmatprep.subr.bf16.mxu0 0
    %141 = vmatpush1.bf16.msra.mxu0 0
    %142 = vmatprep.subr.bf16.mxu0 0
    %143 = vmatpush1.bf16.msra.mxu0 0
    %144 = vmatprep.subr.bf16.mxu0 0
    %145 = vmatpush1.bf16.msra.mxu0 0
    %146 = vmatprep.subr.bf16.mxu0 0
    %147 = vmatpush1.bf16.msra.mxu0 0
    %148 = vmatprep.subr.bf16.mxu0 0
    %149 = vmatpush1.bf16.msra.mxu0 0
    %150 = vmatprep.subr.bf16.mxu0 0
    %151 = vmatpush1.bf16.msra.mxu0 0
    %152 = vmatprep.subr.bf16.mxu0 0
    %153 = vmatpush1.bf16.msra.mxu0 0
    %154 = vmatprep.subr.bf16.mxu0 0
    %155 = vmatpush1.bf16.msra.mxu0 0
    %156 = vmatprep.mubr.bf16.mxu0 0
    %157 = vmatmul.mubr.bf16.gmra.mrb[0].mxu0 %v118
    %v158 = vpop.f32.mrb[0].mxu0
    %v159 = vadd.f32 %v114, %v158
    %v160 = vpop.f32.mrb[0].mxu0
    %v161 = vpop.f32.mrb[0].mxu0
    %v162 = vpop.f32.mrb[0].mxu0
    %163 = vdwg.mxu0
    %v164 = vld [vmem:[%s4] sm:$0x3]
    %v165 = vld [vmem:[%s6] sm:$0x3]
    %vm166 = vcmp.ge.f32.partialorder %v159, 0.0
    %v167 = vmul.f32 %v159, 0.01
    %v168 = vsel %vm166, %v159, %v167
    %v169 = vpack.c.bf16 %v159, %v168
    %v170 = vld [vmem:[#allocation2] sm:$0xff]
    %v171 = vld [vmem:[#allocation2 + $0x8] sm:$0xff]
    %v172 = vld [vmem:[#allocation2 + $0x10] sm:$0xff]
    %v173 = vld [vmem:[#allocation2 + $0x18] sm:$0xff]
    %v174 = vld [vmem:[#allocation2 + $0x20] sm:$0xff]
    %v175 = vld [vmem:[#allocation2 + $0x28] sm:$0xff]
    %v176 = vld [vmem:[#allocation2 + $0x30] sm:$0xff]
    %v177 = vld [vmem:[#allocation2 + $0x38] sm:$0xff]
    %v178 = vld [vmem:[#allocation2 + $0x40] sm:$0xff]
    %v179 = vld [vmem:[#allocation2 + $0x48] sm:$0xff]
    %v180 = vld [vmem:[#allocation2 + $0x50] sm:$0xff]
    %v181 = vld [vmem:[#allocation2 + $0x58] sm:$0xff]
    %v182 = vld [vmem:[#allocation2 + $0x60] sm:$0xff]
    %v183 = vld [vmem:[#allocation2 + $0x68] sm:$0xff]
    %v184 = vld [vmem:[#allocation2 + $0x70] sm:$0xff]
    %v185 = vld [vmem:[#allocation2 + $0x78] sm:$0xff]
    %v187 = vlaneseq
    %v188 = vshrl.u32 %v187, 7
    %v189 = vsub.s32 0, %v188
    %v190 = vrot.slane %v164, %v189
    %v191 = vlaneseq
    %v192 = vshrl.u32 %v191, 7
    %v193 = vsub.s32 1, %v192
    %v194 = vrot.slane %v164, %v193
    %v213 = vunpack.c.l.b16 %v170
    %v214 = vunpack.c.h.b16 %v170
    %v215 = vunpack.c.l.b16 %v171
    %v216 = vunpack.c.h.b16 %v171
    %v217 = vunpack.c.l.b16 %v172
    %v218 = vunpack.c.h.b16 %v172
    %v219 = vunpack.c.l.b16 %v173
    %v220 = vunpack.c.h.b16 %v173
    %v221 = vunpack.c.l.b16 %v174
    %v222 = vunpack.c.h.b16 %v174
    %v223 = vunpack.c.l.b16 %v175
    %v224 = vunpack.c.h.b16 %v175
    %v225 = vunpack.c.l.b16 %v176
    %v226 = vunpack.c.h.b16 %v176
    %v227 = vunpack.c.l.b16 %v177
    %v228 = vunpack.c.h.b16 %v177
    %v229 = vunpack.c.l.b16 %v178
    %v230 = vunpack.c.h.b16 %v178
    %v231 = vunpack.c.l.b16 %v179
    %v232 = vunpack.c.h.b16 %v179
    %v233 = vunpack.c.l.b16 %v180
    %v234 = vunpack.c.h.b16 %v180
    %v235 = vunpack.c.l.b16 %v181
    %v236 = vunpack.c.h.b16 %v181
    %v237 = vunpack.c.l.b16 %v182
    %v238 = vunpack.c.h.b16 %v182
    %v239 = vunpack.c.l.b16 %v183
    %v240 = vunpack.c.h.b16 %v183
    %v241 = vunpack.c.l.b16 %v184
    %v242 = vunpack.c.h.b16 %v184
    %v243 = vunpack.c.l.b16 %v185
    %v244 = vunpack.c.h.b16 %v185
    %v245 = vpack.c.b16 %v215, %v213
    %v246 = vpack.c.b16 %v216, %v214
    %v247 = vpack.c.b16 %v219, %v217
    %v248 = vpack.c.b16 %v220, %v218
    %v249 = vpack.c.b16 %v223, %v221
    %v250 = vpack.c.b16 %v224, %v222
    %v251 = vpack.c.b16 %v227, %v225
    %v252 = vpack.c.b16 %v228, %v226
    %v253 = vpack.c.b16 %v231, %v229
    %v254 = vpack.c.b16 %v232, %v230
    %v255 = vpack.c.b16 %v235, %v233
    %v256 = vpack.c.b16 %v236, %v234
    %v257 = vpack.c.b16 %v239, %v237
    %v258 = vpack.c.b16 %v240, %v238
    %v259 = vpack.c.b16 %v243, %v241
    %v260 = vpack.c.b16 %v244, %v242
    %277 = vmatprep.subr.bf16.mxu0 %v246
    %278 = vmatpush1.bf16.msra.mxu0 %v245
    %279 = vmatprep.subr.bf16.mxu0 %v248
    %280 = vmatpush1.bf16.msra.mxu0 %v247
    %281 = vmatprep.subr.bf16.mxu0 %v250
    %282 = vmatpush1.bf16.msra.mxu0 %v249
    %283 = vmatprep.subr.bf16.mxu0 %v252
    %284 = vmatpush1.bf16.msra.mxu0 %v251
    %285 = vmatprep.subr.bf16.mxu0 %v254
    %286 = vmatpush1.bf16.msra.mxu0 %v253
    %287 = vmatprep.subr.bf16.mxu0 %v256
    %288 = vmatpush1.bf16.msra.mxu0 %v255
    %289 = vmatprep.subr.bf16.mxu0 %v258
    %290 = vmatpush1.bf16.msra.mxu0 %v257
    %291 = vmatprep.subr.bf16.mxu0 %v260
    %292 = vmatpush1.bf16.msra.mxu0 %v259
    %293 = vmatprep.subr.bf16.mxu0 0
    %294 = vmatpush1.bf16.msra.mxu0 0
    %295 = vmatprep.subr.bf16.mxu0 0
    %296 = vmatpush1.bf16.msra.mxu0 0
    %297 = vmatprep.subr.bf16.mxu0 0
    %298 = vmatpush1.bf16.msra.mxu0 0
    %299 = vmatprep.subr.bf16.mxu0 0
    %300 = vmatpush1.bf16.msra.mxu0 0
    %301 = vmatprep.subr.bf16.mxu0 0
    %302 = vmatpush1.bf16.msra.mxu0 0
    %303 = vmatprep.subr.bf16.mxu0 0
    %304 = vmatpush1.bf16.msra.mxu0 0
    %305 = vmatprep.subr.bf16.mxu0 0
    %306 = vmatpush1.bf16.msra.mxu0 0
    %307 = vmatprep.subr.bf16.mxu0 0
    %308 = vmatpush1.bf16.msra.mxu0 0
    %309 = vmatprep.mubr.bf16.mxu0 0
    %310 = vmatmul.mubr.bf16.gmra.mrb[0].mxu0 %v169
    %v311 = vpop.f32.mrb[0].mxu0
    %v312 = vadd.f32 %v190, %v311
    %v313 = vpop.f32.mrb[0].mxu0
    %v314 = vadd.f32 %v194, %v313
    %v315 = vpop.f32.mrb[0].mxu0
    %v316 = vadd.f32 %v190, %v315
    %v317 = vpop.f32.mrb[0].mxu0
    %v318 = vadd.f32 %v194, %v317
    %319 = vdwg.mxu0
    %vm320 = vcmp.ge.f32.partialorder %v312, 0.0
    %vm321 = vcmp.ge.f32.partialorder %v314, 0.0
    %v322 = vmul.f32 %v312, 0.01
    %v323 = vmul.f32 %v314, 0.01
    %v324 = vsel %vm320, %v312, %v322
    %v325 = vsel %vm321, %v314, %v323
    %v326 = vpack.c.bf16 %v324, %v324
    %v327 = vpack.c.bf16 %v325, %v325
    %v328 = vld [vmem:[%s5] sm:$0xff]
    %v329 = vld [vmem:[%s5 + $0x8] sm:$0xff]
    %v330 = vld [vmem:[%s5 + $0x10] sm:$0xff]
    %v331 = vld [vmem:[%s5 + $0x18] sm:$0xff]
    %v332 = vld [vmem:[%s5 + $0x20] sm:$0xff]
    %v333 = vld [vmem:[%s5 + $0x28] sm:$0xff]
    %v334 = vld [vmem:[%s5 + $0x30] sm:$0xff]
    %v335 = vld [vmem:[%s5 + $0x38] sm:$0xff]
    %v336 = vld [vmem:[%s5 + $0x40] sm:$0xff]
    %v337 = vld [vmem:[%s5 + $0x48] sm:$0xff]
    %v338 = vld [vmem:[%s5 + $0x50] sm:$0xff]
    %v339 = vld [vmem:[%s5 + $0x58] sm:$0xff]
    %v340 = vld [vmem:[%s5 + $0x60] sm:$0xff]
    %v341 = vld [vmem:[%s5 + $0x68] sm:$0xff]
    %v342 = vld [vmem:[%s5 + $0x70] sm:$0xff]
    %v343 = vld [vmem:[%s5 + $0x78] sm:$0xff]
    %v344 = vld [vmem:[%s5 + $0x80] sm:$0xff]
    %v345 = vld [vmem:[%s5 + $0x88] sm:$0xff]
    %v346 = vld [vmem:[%s5 + $0x90] sm:$0xff]
    %v347 = vld [vmem:[%s5 + $0x98] sm:$0xff]
    %v348 = vld [vmem:[%s5 + $0xa0] sm:$0xff]
    %v349 = vld [vmem:[%s5 + $0xa8] sm:$0xff]
    %v350 = vld [vmem:[%s5 + $0xb0] sm:$0xff]
    %v351 = vld [vmem:[%s5 + $0xb8] sm:$0xff]
    %v352 = vld [vmem:[%s5 + $0xc0] sm:$0xff]
    %v353 = vld [vmem:[%s5 + $0xc8] sm:$0xff]
    %v354 = vld [vmem:[%s5 + $0xd0] sm:$0xff]
    %v355 = vld [vmem:[%s5 + $0xd8] sm:$0xff]
    %v356 = vld [vmem:[%s5 + $0xe0] sm:$0xff]
    %v357 = vld [vmem:[%s5 + $0xe8] sm:$0xff]
    %v358 = vld [vmem:[%s5 + $0xf0] sm:$0xff]
    %v359 = vld [vmem:[%s5 + $0xf8] sm:$0xff]
    %v361 = vlaneseq
    %v362 = vshrl.u32 %v361, 7
    %v363 = vsub.s32 0, %v362
    %v364 = vrot.slane %v165, %v363
    %v365 = vlaneseq
    %v366 = vshrl.u32 %v365, 7
    %v367 = vsub.s32 1, %v366
    %v368 = vrot.slane %v165, %v367
    %v403 = vunpack.c.l.b16 %v328
    %v404 = vunpack.c.h.b16 %v328
    %v405 = vunpack.c.l.b16 %v329
    %v406 = vunpack.c.h.b16 %v329
    %v407 = vunpack.c.l.b16 %v330
    %v408 = vunpack.c.h.b16 %v330
    %v409 = vunpack.c.l.b16 %v331
    %v410 = vunpack.c.h.b16 %v331
    %v411 = vunpack.c.l.b16 %v332
    %v412 = vunpack.c.h.b16 %v332
    %v413 = vunpack.c.l.b16 %v333
    %v414 = vunpack.c.h.b16 %v333
    %v415 = vunpack.c.l.b16 %v334
    %v416 = vunpack.c.h.b16 %v334
    %v417 = vunpack.c.l.b16 %v335
    %v418 = vunpack.c.h.b16 %v335
    %v419 = vunpack.c.l.b16 %v336
    %v420 = vunpack.c.h.b16 %v336
    %v421 = vunpack.c.l.b16 %v337
    %v422 = vunpack.c.h.b16 %v337
    %v423 = vunpack.c.l.b16 %v338
    %v424 = vunpack.c.h.b16 %v338
    %v425 = vunpack.c.l.b16 %v339
    %v426 = vunpack.c.h.b16 %v339
    %v427 = vunpack.c.l.b16 %v340
    %v428 = vunpack.c.h.b16 %v340
    %v429 = vunpack.c.l.b16 %v341
    %v430 = vunpack.c.h.b16 %v341
    %v431 = vunpack.c.l.b16 %v342
    %v432 = vunpack.c.h.b16 %v342
    %v433 = vunpack.c.l.b16 %v343
    %v434 = vunpack.c.h.b16 %v343
    %v435 = vunpack.c.l.b16 %v344
    %v436 = vunpack.c.h.b16 %v344
    %v437 = vunpack.c.l.b16 %v345
    %v438 = vunpack.c.h.b16 %v345
    %v439 = vunpack.c.l.b16 %v346
    %v440 = vunpack.c.h.b16 %v346
    %v441 = vunpack.c.l.b16 %v347
    %v442 = vunpack.c.h.b16 %v347
    %v443 = vunpack.c.l.b16 %v348
    %v444 = vunpack.c.h.b16 %v348
    %v445 = vunpack.c.l.b16 %v349
    %v446 = vunpack.c.h.b16 %v349
    %v447 = vunpack.c.l.b16 %v350
    %v448 = vunpack.c.h.b16 %v350
    %v449 = vunpack.c.l.b16 %v351
    %v450 = vunpack.c.h.b16 %v351
    %v451 = vunpack.c.l.b16 %v352
    %v452 = vunpack.c.h.b16 %v352
    %v453 = vunpack.c.l.b16 %v353
    %v454 = vunpack.c.h.b16 %v353
    %v455 = vunpack.c.l.b16 %v354
    %v456 = vunpack.c.h.b16 %v354
    %v457 = vunpack.c.l.b16 %v355
    %v458 = vunpack.c.h.b16 %v355
    %v459 = vunpack.c.l.b16 %v356
    %v460 = vunpack.c.h.b16 %v356
    %v461 = vunpack.c.l.b16 %v357
    %v462 = vunpack.c.h.b16 %v357
    %v463 = vunpack.c.l.b16 %v358
    %v464 = vunpack.c.h.b16 %v358
    %v465 = vunpack.c.l.b16 %v359
    %v466 = vunpack.c.h.b16 %v359
    %v467 = vpack.c.b16 %v405, %v403
    %v468 = vpack.c.b16 %v406, %v404
    %v469 = vpack.c.b16 %v409, %v407
    %v470 = vpack.c.b16 %v410, %v408
    %v471 = vpack.c.b16 %v413, %v411
    %v472 = vpack.c.b16 %v414, %v412
    %v473 = vpack.c.b16 %v417, %v415
    %v474 = vpack.c.b16 %v418, %v416
    %v475 = vpack.c.b16 %v421, %v419
    %v476 = vpack.c.b16 %v422, %v420
    %v477 = vpack.c.b16 %v425, %v423
    %v478 = vpack.c.b16 %v426, %v424
    %v479 = vpack.c.b16 %v429, %v427
    %v480 = vpack.c.b16 %v430, %v428
    %v481 = vpack.c.b16 %v433, %v431
    %v482 = vpack.c.b16 %v434, %v432
    %v483 = vpack.c.b16 %v437, %v435
    %v484 = vpack.c.b16 %v438, %v436
    %v485 = vpack.c.b16 %v441, %v439
    %v486 = vpack.c.b16 %v442, %v440
    %v487 = vpack.c.b16 %v445, %v443
    %v488 = vpack.c.b16 %v446, %v444
    %v489 = vpack.c.b16 %v449, %v447
    %v490 = vpack.c.b16 %v450, %v448
    %v491 = vpack.c.b16 %v453, %v451
    %v492 = vpack.c.b16 %v454, %v452
    %v493 = vpack.c.b16 %v457, %v455
    %v494 = vpack.c.b16 %v458, %v456
    %v495 = vpack.c.b16 %v461, %v459
    %v496 = vpack.c.b16 %v462, %v460
    %v497 = vpack.c.b16 %v465, %v463
    %v498 = vpack.c.b16 %v466, %v464
    %531 = vmatprep.subr.bf16.mxu0 %v468
    %532 = vmatpush1.bf16.msra.mxu0 %v467
    %533 = vmatprep.subr.bf16.mxu0 %v470
    %534 = vmatpush1.bf16.msra.mxu0 %v469
    %535 = vmatprep.subr.bf16.mxu0 %v472
    %536 = vmatpush1.bf16.msra.mxu0 %v471
    %537 = vmatprep.subr.bf16.mxu0 %v474
    %538 = vmatpush1.bf16.msra.mxu0 %v473
    %539 = vmatprep.subr.bf16.mxu0 %v476
    %540 = vmatpush1.bf16.msra.mxu0 %v475
    %541 = vmatprep.subr.bf16.mxu0 %v478
    %542 = vmatpush1.bf16.msra.mxu0 %v477
    %543 = vmatprep.subr.bf16.mxu0 %v480
    %544 = vmatpush1.bf16.msra.mxu0 %v479
    %545 = vmatprep.subr.bf16.mxu0 %v482
    %546 = vmatpush1.bf16.msra.mxu0 %v481
    %547 = vmatprep.subr.bf16.mxu0 %v484
    %548 = vmatpush1.bf16.msra.mxu0 %v483
    %549 = vmatprep.subr.bf16.mxu0 %v486
    %550 = vmatpush1.bf16.msra.mxu0 %v485
    %551 = vmatprep.subr.bf16.mxu0 %v488
    %552 = vmatpush1.bf16.msra.mxu0 %v487
    %553 = vmatprep.subr.bf16.mxu0 %v490
    %554 = vmatpush1.bf16.msra.mxu0 %v489
    %555 = vmatprep.subr.bf16.mxu0 %v492
    %556 = vmatpush1.bf16.msra.mxu0 %v491
    %557 = vmatprep.subr.bf16.mxu0 %v494
    %558 = vmatpush1.bf16.msra.mxu0 %v493
    %559 = vmatprep.subr.bf16.mxu0 %v496
    %560 = vmatpush1.bf16.msra.mxu0 %v495
    %561 = vmatprep.subr.bf16.mxu0 %v498
    %562 = vmatpush1.bf16.msra.mxu0 %v497
    %563 = vmatprep.mubr.bf16.mxu0 %v327
    %564 = vmatmul.mubr.bf16.gmra.mrb[0].mxu0 %v326
    %v565 = vpop.f32.mrb[0].mxu0
    %v566 = vadd.f32 %v364, %v565
    %v567 = vpop.f32.mrb[0].mxu0
    %v568 = vadd.f32 %v368, %v567
    %v569 = vpop.f32.mrb[0].mxu0
    %v570 = vpop.f32.mrb[0].mxu0
    %571 = vdwg.mxu0
    %v572 = vadd.f32 %v316, %v566
    %v573 = vadd.f32 %v318, %v568
    %v574 = vld [vmem:[%s8] sm:$0x3]
    %v575 = vld [vmem:[%s10] sm:$0x3]
    %vm576 = vcmp.ge.f32.partialorder %v572, 0.0
    %vm577 = vcmp.ge.f32.partialorder %v573, 0.0
    %v578 = vmul.f32 %v572, 0.01
    %v579 = vmul.f32 %v573, 0.01
    %v580 = vsel %vm576, %v572, %v578
    %v581 = vsel %vm577, %v573, %v579
    %v582 = vpack.c.bf16 %v572, %v580
    %v583 = vpack.c.bf16 %v573, %v581
    %v584 = vld [vmem:[#allocation4] sm:$0xff]
    %v585 = vld [vmem:[#allocation4 + $0x8] sm:$0xff]
    %v586 = vld [vmem:[#allocation4 + $0x10] sm:$0xff]
    %v587 = vld [vmem:[#allocation4 + $0x18] sm:$0xff]
    %v588 = vld [vmem:[#allocation4 + $0x20] sm:$0xff]
    %v589 = vld [vmem:[#allocation4 + $0x28] sm:$0xff]
    %v590 = vld [vmem:[#allocation4 + $0x30] sm:$0xff]
    %v591 = vld [vmem:[#allocation4 + $0x38] sm:$0xff]
    %v592 = vld [vmem:[#allocation4 + $0x40] sm:$0xff]
    %v593 = vld [vmem:[#allocation4 + $0x48] sm:$0xff]
    %v594 = vld [vmem:[#allocation4 + $0x50] sm:$0xff]
    %v595 = vld [vmem:[#allocation4 + $0x58] sm:$0xff]
    %v596 = vld [vmem:[#allocation4 + $0x60] sm:$0xff]
    %v597 = vld [vmem:[#allocation4 + $0x68] sm:$0xff]
    %v598 = vld [vmem:[#allocation4 + $0x70] sm:$0xff]
    %v599 = vld [vmem:[#allocation4 + $0x78] sm:$0xff]
    %v600 = vld [vmem:[#allocation4 + $0x80] sm:$0xff]
    %v601 = vld [vmem:[#allocation4 + $0x88] sm:$0xff]
    %v602 = vld [vmem:[#allocation4 + $0x90] sm:$0xff]
    %v603 = vld [vmem:[#allocation4 + $0x98] sm:$0xff]
    %v604 = vld [vmem:[#allocation4 + $0xa0] sm:$0xff]
    %v605 = vld [vmem:[#allocation4 + $0xa8] sm:$0xff]
    %v606 = vld [vmem:[#allocation4 + $0xb0] sm:$0xff]
    %v607 = vld [vmem:[#allocation4 + $0xb8] sm:$0xff]
    %v608 = vld [vmem:[#allocation4 + $0xc0] sm:$0xff]
    %v609 = vld [vmem:[#allocation4 + $0xc8] sm:$0xff]
    %v610 = vld [vmem:[#allocation4 + $0xd0] sm:$0xff]
    %v611 = vld [vmem:[#allocation4 + $0xd8] sm:$0xff]
    %v612 = vld [vmem:[#allocation4 + $0xe0] sm:$0xff]
    %v613 = vld [vmem:[#allocation4 + $0xe8] sm:$0xff]
    %v614 = vld [vmem:[#allocation4 + $0xf0] sm:$0xff]
    %v615 = vld [vmem:[#allocation4 + $0xf8] sm:$0xff]
    %v617 = vlaneseq
    %v618 = vshrl.u32 %v617, 7
    %v619 = vsub.s32 0, %v618
    %v620 = vrot.slane %v574, %v619
    %v621 = vlaneseq
    %v622 = vshrl.u32 %v621, 7
    %v623 = vsub.s32 1, %v622
    %v624 = vrot.slane %v574, %v623
    %v659 = vunpack.c.l.b16 %v584
    %v660 = vunpack.c.h.b16 %v584
    %v661 = vunpack.c.l.b16 %v585
    %v662 = vunpack.c.h.b16 %v585
    %v663 = vunpack.c.l.b16 %v586
    %v664 = vunpack.c.h.b16 %v586
    %v665 = vunpack.c.l.b16 %v587
    %v666 = vunpack.c.h.b16 %v587
    %v667 = vunpack.c.l.b16 %v588
    %v668 = vunpack.c.h.b16 %v588
    %v669 = vunpack.c.l.b16 %v589
    %v670 = vunpack.c.h.b16 %v589
    %v671 = vunpack.c.l.b16 %v590
    %v672 = vunpack.c.h.b16 %v590
    %v673 = vunpack.c.l.b16 %v591
    %v674 = vunpack.c.h.b16 %v591
    %v675 = vunpack.c.l.b16 %v592
    %v676 = vunpack.c.h.b16 %v592
    %v677 = vunpack.c.l.b16 %v593
    %v678 = vunpack.c.h.b16 %v593
    %v679 = vunpack.c.l.b16 %v594
    %v680 = vunpack.c.h.b16 %v594
    %v681 = vunpack.c.l.b16 %v595
    %v682 = vunpack.c.h.b16 %v595
    %v683 = vunpack.c.l.b16 %v596
    %v684 = vunpack.c.h.b16 %v596
    %v685 = vunpack.c.l.b16 %v597
    %v686 = vunpack.c.h.b16 %v597
    %v687 = vunpack.c.l.b16 %v598
    %v688 = vunpack.c.h.b16 %v598
    %v689 = vunpack.c.l.b16 %v599
    %v690 = vunpack.c.h.b16 %v599
    %v691 = vunpack.c.l.b16 %v600
    %v692 = vunpack.c.h.b16 %v600
    %v693 = vunpack.c.l.b16 %v601
    %v694 = vunpack.c.h.b16 %v601
    %v695 = vunpack.c.l.b16 %v602
    %v696 = vunpack.c.h.b16 %v602
    %v697 = vunpack.c.l.b16 %v603
    %v698 = vunpack.c.h.b16 %v603
    %v699 = vunpack.c.l.b16 %v604
    %v700 = vunpack.c.h.b16 %v604
    %v701 = vunpack.c.l.b16 %v605
    %v702 = vunpack.c.h.b16 %v605
    %v703 = vunpack.c.l.b16 %v606
    %v704 = vunpack.c.h.b16 %v606
    %v705 = vunpack.c.l.b16 %v607
    %v706 = vunpack.c.h.b16 %v607
    %v707 = vunpack.c.l.b16 %v608
    %v708 = vunpack.c.h.b16 %v608
    %v709 = vunpack.c.l.b16 %v609
    %v710 = vunpack.c.h.b16 %v609
    %v711 = vunpack.c.l.b16 %v610
    %v712 = vunpack.c.h.b16 %v610
    %v713 = vunpack.c.l.b16 %v611
    %v714 = vunpack.c.h.b16 %v611
    %v715 = vunpack.c.l.b16 %v612
    %v716 = vunpack.c.h.b16 %v612
    %v717 = vunpack.c.l.b16 %v613
    %v718 = vunpack.c.h.b16 %v613
    %v719 = vunpack.c.l.b16 %v614
    %v720 = vunpack.c.h.b16 %v614
    %v721 = vunpack.c.l.b16 %v615
    %v722 = vunpack.c.h.b16 %v615
    %v723 = vpack.c.b16 %v661, %v659
    %v724 = vpack.c.b16 %v662, %v660
    %v725 = vpack.c.b16 %v665, %v663
    %v726 = vpack.c.b16 %v666, %v664
    %v727 = vpack.c.b16 %v669, %v667
    %v728 = vpack.c.b16 %v670, %v668
    %v729 = vpack.c.b16 %v673, %v671
    %v730 = vpack.c.b16 %v674, %v672
    %v731 = vpack.c.b16 %v677, %v675
    %v732 = vpack.c.b16 %v678, %v676
    %v733 = vpack.c.b16 %v681, %v679
    %v734 = vpack.c.b16 %v682, %v680
    %v735 = vpack.c.b16 %v685, %v683
    %v736 = vpack.c.b16 %v686, %v684
    %v737 = vpack.c.b16 %v689, %v687
    %v738 = vpack.c.b16 %v690, %v688
    %v739 = vpack.c.b16 %v693, %v691
    %v740 = vpack.c.b16 %v694, %v692
    %v741 = vpack.c.b16 %v697, %v695
    %v742 = vpack.c.b16 %v698, %v696
    %v743 = vpack.c.b16 %v701, %v699
    %v744 = vpack.c.b16 %v702, %v700
    %v745 = vpack.c.b16 %v705, %v703
    %v746 = vpack.c.b16 %v706, %v704
    %v747 = vpack.c.b16 %v709, %v707
    %v748 = vpack.c.b16 %v710, %v708
    %v749 = vpack.c.b16 %v713, %v711
    %v750 = vpack.c.b16 %v714, %v712
    %v751 = vpack.c.b16 %v717, %v715
    %v752 = vpack.c.b16 %v718, %v716
    %v753 = vpack.c.b16 %v721, %v719
    %v754 = vpack.c.b16 %v722, %v720
    %787 = vmatprep.subr.bf16.mxu0 %v724
    %788 = vmatpush1.bf16.msra.mxu0 %v723
    %789 = vmatprep.subr.bf16.mxu0 %v726
    %790 = vmatpush1.bf16.msra.mxu0 %v725
    %791 = vmatprep.subr.bf16.mxu0 %v728
    %792 = vmatpush1.bf16.msra.mxu0 %v727
    %793 = vmatprep.subr.bf16.mxu0 %v730
    %794 = vmatpush1.bf16.msra.mxu0 %v729
    %795 = vmatprep.subr.bf16.mxu0 %v732
    %796 = vmatpush1.bf16.msra.mxu0 %v731
    %797 = vmatprep.subr.bf16.mxu0 %v734
    %798 = vmatpush1.bf16.msra.mxu0 %v733
    %799 = vmatprep.subr.bf16.mxu0 %v736
    %800 = vmatpush1.bf16.msra.mxu0 %v735
    %801 = vmatprep.subr.bf16.mxu0 %v738
    %802 = vmatpush1.bf16.msra.mxu0 %v737
    %803 = vmatprep.subr.bf16.mxu0 %v740
    %804 = vmatpush1.bf16.msra.mxu0 %v739
    %805 = vmatprep.subr.bf16.mxu0 %v742
    %806 = vmatpush1.bf16.msra.mxu0 %v741
    %807 = vmatprep.subr.bf16.mxu0 %v744
    %808 = vmatpush1.bf16.msra.mxu0 %v743
    %809 = vmatprep.subr.bf16.mxu0 %v746
    %810 = vmatpush1.bf16.msra.mxu0 %v745
    %811 = vmatprep.subr.bf16.mxu0 %v748
    %812 = vmatpush1.bf16.msra.mxu0 %v747
    %813 = vmatprep.subr.bf16.mxu0 %v750
    %814 = vmatpush1.bf16.msra.mxu0 %v749
    %815 = vmatprep.subr.bf16.mxu0 %v752
    %816 = vmatpush1.bf16.msra.mxu0 %v751
    %817 = vmatprep.subr.bf16.mxu0 %v754
    %818 = vmatpush1.bf16.msra.mxu0 %v753
    %819 = vmatprep.mubr.bf16.mxu0 %v583
    %820 = vmatmul.mubr.bf16.gmra.mrb[0].mxu0 %v582
    %v821 = vpop.f32.mrb[0].mxu0
    %v822 = vadd.f32 %v620, %v821
    %v823 = vpop.f32.mrb[0].mxu0
    %v824 = vadd.f32 %v624, %v823
    %v825 = vpop.f32.mrb[0].mxu0
    %v826 = vadd.f32 %v620, %v825
    %v827 = vpop.f32.mrb[0].mxu0
    %v828 = vadd.f32 %v624, %v827
    %829 = vdwg.mxu0
    %vm830 = vcmp.ge.f32.partialorder %v822, 0.0
    %vm831 = vcmp.ge.f32.partialorder %v824, 0.0
    %v832 = vmul.f32 %v822, 0.01
    %v833 = vmul.f32 %v824, 0.01
    %v834 = vsel %vm830, %v822, %v832
    %v835 = vsel %vm831, %v824, %v833
    %v836 = vpack.c.bf16 %v834, %v834
    %v837 = vpack.c.bf16 %v835, %v835
    %v838 = vld [vmem:[#allocation6] sm:$0xff]
    %v839 = vld [vmem:[#allocation6 + $0x8] sm:$0xff]
    %v840 = vld [vmem:[#allocation6 + $0x10] sm:$0xff]
    %v841 = vld [vmem:[#allocation6 + $0x18] sm:$0xff]
    %v842 = vld [vmem:[#allocation6 + $0x20] sm:$0xff]
    %v843 = vld [vmem:[#allocation6 + $0x28] sm:$0xff]
    %v844 = vld [vmem:[#allocation6 + $0x30] sm:$0xff]
    %v845 = vld [vmem:[#allocation6 + $0x38] sm:$0xff]
    %v846 = vld [vmem:[#allocation6 + $0x40] sm:$0xff]
    %v847 = vld [vmem:[#allocation6 + $0x48] sm:$0xff]
    %v848 = vld [vmem:[#allocation6 + $0x50] sm:$0xff]
    %v849 = vld [vmem:[#allocation6 + $0x58] sm:$0xff]
    %v850 = vld [vmem:[#allocation6 + $0x60] sm:$0xff]
    %v851 = vld [vmem:[#allocation6 + $0x68] sm:$0xff]
    %v852 = vld [vmem:[#allocation6 + $0x70] sm:$0xff]
    %v853 = vld [vmem:[#allocation6 + $0x78] sm:$0xff]
    %v854 = vld [vmem:[#allocation6 + $0x80] sm:$0xff]
    %v855 = vld [vmem:[#allocation6 + $0x88] sm:$0xff]
    %v856 = vld [vmem:[#allocation6 + $0x90] sm:$0xff]
    %v857 = vld [vmem:[#allocation6 + $0x98] sm:$0xff]
    %v858 = vld [vmem:[#allocation6 + $0xa0] sm:$0xff]
    %v859 = vld [vmem:[#allocation6 + $0xa8] sm:$0xff]
    %v860 = vld [vmem:[#allocation6 + $0xb0] sm:$0xff]
    %v861 = vld [vmem:[#allocation6 + $0xb8] sm:$0xff]
    %v862 = vld [vmem:[#allocation6 + $0xc0] sm:$0xff]
    %v863 = vld [vmem:[#allocation6 + $0xc8] sm:$0xff]
    %v864 = vld [vmem:[#allocation6 + $0xd0] sm:$0xff]
    %v865 = vld [vmem:[#allocation6 + $0xd8] sm:$0xff]
    %v866 = vld [vmem:[#allocation6 + $0xe0] sm:$0xff]
    %v867 = vld [vmem:[#allocation6 + $0xe8] sm:$0xff]
    %v868 = vld [vmem:[#allocation6 + $0xf0] sm:$0xff]
    %v869 = vld [vmem:[#allocation6 + $0xf8] sm:$0xff]
    %v871 = vlaneseq
    %v872 = vshrl.u32 %v871, 7
    %v873 = vsub.s32 0, %v872
    %v874 = vrot.slane %v575, %v873
    %v875 = vlaneseq
    %v876 = vshrl.u32 %v875, 7
    %v877 = vsub.s32 1, %v876
    %v878 = vrot.slane %v575, %v877
    %v913 = vunpack.c.l.b16 %v838
    %v914 = vunpack.c.h.b16 %v838
    %v915 = vunpack.c.l.b16 %v839
    %v916 = vunpack.c.h.b16 %v839
    %v917 = vunpack.c.l.b16 %v840
    %v918 = vunpack.c.h.b16 %v840
    %v919 = vunpack.c.l.b16 %v841
    %v920 = vunpack.c.h.b16 %v841
    %v921 = vunpack.c.l.b16 %v842
    %v922 = vunpack.c.h.b16 %v842
    %v923 = vunpack.c.l.b16 %v843
    %v924 = vunpack.c.h.b16 %v843
    %v925 = vunpack.c.l.b16 %v844
    %v926 = vunpack.c.h.b16 %v844
    %v927 = vunpack.c.l.b16 %v845
    %v928 = vunpack.c.h.b16 %v845
    %v929 = vunpack.c.l.b16 %v846
    %v930 = vunpack.c.h.b16 %v846
    %v931 = vunpack.c.l.b16 %v847
    %v932 = vunpack.c.h.b16 %v847
    %v933 = vunpack.c.l.b16 %v848
    %v934 = vunpack.c.h.b16 %v848
    %v935 = vunpack.c.l.b16 %v849
    %v936 = vunpack.c.h.b16 %v849
    %v937 = vunpack.c.l.b16 %v850
    %v938 = vunpack.c.h.b16 %v850
    %v939 = vunpack.c.l.b16 %v851
    %v940 = vunpack.c.h.b16 %v851
    %v941 = vunpack.c.l.b16 %v852
    %v942 = vunpack.c.h.b16 %v852
    %v943 = vunpack.c.l.b16 %v853
    %v944 = vunpack.c.h.b16 %v853
    %v945 = vunpack.c.l.b16 %v854
    %v946 = vunpack.c.h.b16 %v854
    %v947 = vunpack.c.l.b16 %v855
    %v948 = vunpack.c.h.b16 %v855
    %v949 = vunpack.c.l.b16 %v856
    %v950 = vunpack.c.h.b16 %v856
    %v951 = vunpack.c.l.b16 %v857
    %v952 = vunpack.c.h.b16 %v857
    %v953 = vunpack.c.l.b16 %v858
    %v954 = vunpack.c.h.b16 %v858
    %v955 = vunpack.c.l.b16 %v859
    %v956 = vunpack.c.h.b16 %v859
    %v957 = vunpack.c.l.b16 %v860
    %v958 = vunpack.c.h.b16 %v860
    %v959 = vunpack.c.l.b16 %v861
    %v960 = vunpack.c.h.b16 %v861
    %v961 = vunpack.c.l.b16 %v862
    %v962 = vunpack.c.h.b16 %v862
    %v963 = vunpack.c.l.b16 %v863
    %v964 = vunpack.c.h.b16 %v863
    %v965 = vunpack.c.l.b16 %v864
    %v966 = vunpack.c.h.b16 %v864
    %v967 = vunpack.c.l.b16 %v865
    %v968 = vunpack.c.h.b16 %v865
    %v969 = vunpack.c.l.b16 %v866
    %v970 = vunpack.c.h.b16 %v866
    %v971 = vunpack.c.l.b16 %v867
    %v972 = vunpack.c.h.b16 %v867
    %v973 = vunpack.c.l.b16 %v868
    %v974 = vunpack.c.h.b16 %v868
    %v975 = vunpack.c.l.b16 %v869
    %v976 = vunpack.c.h.b16 %v869
    %v977 = vpack.c.b16 %v915, %v913
    %v978 = vpack.c.b16 %v916, %v914
    %v979 = vpack.c.b16 %v919, %v917
    %v980 = vpack.c.b16 %v920, %v918
    %v981 = vpack.c.b16 %v923, %v921
    %v982 = vpack.c.b16 %v924, %v922
    %v983 = vpack.c.b16 %v927, %v925
    %v984 = vpack.c.b16 %v928, %v926
    %v985 = vpack.c.b16 %v931, %v929
    %v986 = vpack.c.b16 %v932, %v930
    %v987 = vpack.c.b16 %v935, %v933
    %v988 = vpack.c.b16 %v936, %v934
    %v989 = vpack.c.b16 %v939, %v937
    %v990 = vpack.c.b16 %v940, %v938
    %v991 = vpack.c.b16 %v943, %v941
    %v992 = vpack.c.b16 %v944, %v942
    %v993 = vpack.c.b16 %v947, %v945
    %v994 = vpack.c.b16 %v948, %v946
    %v995 = vpack.c.b16 %v951, %v949
    %v996 = vpack.c.b16 %v952, %v950
    %v997 = vpack.c.b16 %v955, %v953
    %v998 = vpack.c.b16 %v956, %v954
    %v999 = vpack.c.b16 %v959, %v957
    %v1000 = vpack.c.b16 %v960, %v958
    %v1001 = vpack.c.b16 %v963, %v961
    %v1002 = vpack.c.b16 %v964, %v962
    %v1003 = vpack.c.b16 %v967, %v965
    %v1004 = vpack.c.b16 %v968, %v966
    %v1005 = vpack.c.b16 %v971, %v969
    %v1006 = vpack.c.b16 %v972, %v970
    %v1007 = vpack.c.b16 %v975, %v973
    %v1008 = vpack.c.b16 %v976, %v974
    %1041 = vmatprep.subr.bf16.mxu0 %v978
    %1042 = vmatpush1.bf16.msra.mxu0 %v977
    %1043 = vmatprep.subr.bf16.mxu0 %v980
    %1044 = vmatpush1.bf16.msra.mxu0 %v979
    %1045 = vmatprep.subr.bf16.mxu0 %v982
    %1046 = vmatpush1.bf16.msra.mxu0 %v981
    %1047 = vmatprep.subr.bf16.mxu0 %v984
    %1048 = vmatpush1.bf16.msra.mxu0 %v983
    %1049 = vmatprep.subr.bf16.mxu0 %v986
    %1050 = vmatpush1.bf16.msra.mxu0 %v985
    %1051 = vmatprep.subr.bf16.mxu0 %v988
    %1052 = vmatpush1.bf16.msra.mxu0 %v987
    %1053 = vmatprep.subr.bf16.mxu0 %v990
    %1054 = vmatpush1.bf16.msra.mxu0 %v989
    %1055 = vmatprep.subr.bf16.mxu0 %v992
    %1056 = vmatpush1.bf16.msra.mxu0 %v991
    %1057 = vmatprep.subr.bf16.mxu0 %v994
    %1058 = vmatpush1.bf16.msra.mxu0 %v993
    %1059 = vmatprep.subr.bf16.mxu0 %v996
    %1060 = vmatpush1.bf16.msra.mxu0 %v995
    %1061 = vmatprep.subr.bf16.mxu0 %v998
    %1062 = vmatpush1.bf16.msra.mxu0 %v997
    %1063 = vmatprep.subr.bf16.mxu0 %v1000
    %1064 = vmatpush1.bf16.msra.mxu0 %v999
    %1065 = vmatprep.subr.bf16.mxu0 %v1002
    %1066 = vmatpush1.bf16.msra.mxu0 %v1001
    %1067 = vmatprep.subr.bf16.mxu0 %v1004
    %1068 = vmatpush1.bf16.msra.mxu0 %v1003
    %1069 = vmatprep.subr.bf16.mxu0 %v1006
    %1070 = vmatpush1.bf16.msra.mxu0 %v1005
    %1071 = vmatprep.subr.bf16.mxu0 %v1008
    %1072 = vmatpush1.bf16.msra.mxu0 %v1007
    %1073 = vmatprep.mubr.bf16.mxu0 %v837
    %1074 = vmatmul.mubr.bf16.gmra.mrb[0].mxu0 %v836
    %v1075 = vpop.f32.mrb[0].mxu0
    %v1076 = vadd.f32 %v874, %v1075
    %v1077 = vpop.f32.mrb[0].mxu0
    %v1078 = vadd.f32 %v878, %v1077
    %v1079 = vpop.f32.mrb[0].mxu0
    %v1080 = vpop.f32.mrb[0].mxu0
    %1081 = vdwg.mxu0
    %v1082 = vadd.f32 %v826, %v1076
    %v1083 = vadd.f32 %v828, %v1078
    %v1084 = vlaneseq
    %v1085 = vshrl.u32 %v1084, 7
    %vm1086 = vcmp.lt.s32.totalorder %v1085, 2
    %v1087 = vsel %vm1086, 1, 0
    %v1088 = vcvt.s32.f32 %v1087
    %v1089 = vmul.f32 %v1082, %v1088
    %v1090 = vmul.f32 %v1083, %v1088
    %v1091 = vrot.slane %v1089, 4
    %v1092 = vadd.f32 %v1089, %v1091
    %v1093 = vrot.slane %v1092, 2
    %v1094 = vadd.f32 %v1092, %v1093
    %v1095 = vrot.slane %v1094, 1
    %v1096 = vadd.f32 %v1094, %v1095
    %v1097 = vrot.slane %v1090, 4
    %v1098 = vadd.f32 %v1090, %v1097
    %v1099 = vrot.slane %v1098, 2
    %v1100 = vadd.f32 %v1098, %v1099
    %v1101 = vrot.slane %v1100, 1
    %v1102 = vadd.f32 %v1100, %v1101
    %v1103 = vmul.f32 %v1089, %v1089
    %v1104 = vmul.f32 %v1090, %v1090
    %v1105 = vrot.slane %v1103, 4
    %v1106 = vadd.f32 %v1103, %v1105
    %v1107 = vrot.slane %v1106, 2
    %v1108 = vadd.f32 %v1106, %v1107
    %v1109 = vrot.slane %v1108, 1
    %v1110 = vadd.f32 %v1108, %v1109
    %v1111 = vrot.slane %v1104, 4
    %v1112 = vadd.f32 %v1104, %v1111
    %v1113 = vrot.slane %v1112, 2
    %v1114 = vadd.f32 %v1112, %v1113
    %v1115 = vrot.slane %v1114, 1
    %v1116 = vadd.f32 %v1114, %v1115
    %vm1117 = vcmask 1040384
    %v1118 = vsel %vm1117, %v1096, %v1110
    %v1119 = vsel %vm1117, %v1102, %v1116
    %v1120 = vld [vmem:[%s11] sm:$0xff]
    %v1121 = vld [vmem:[%s11 + $0x8] sm:$0xff]
    %v1122 = vld [vmem:[%s11 + $0x10] sm:$0xff]
    %v1123 = vld [vmem:[%s11 + $0x18] sm:$0xff]
    %v1124 = vld [vmem:[%s11 + $0x20] sm:$0xff]
    %v1125 = vld [vmem:[%s11 + $0x28] sm:$0xff]
    %v1126 = vld [vmem:[%s11 + $0x30] sm:$0xff]
    %v1127 = vld [vmem:[%s11 + $0x38] sm:$0xff]
    %v1128 = vld [vmem:[%s11 + $0x40] sm:$0xff]
    %v1129 = vld [vmem:[%s11 + $0x48] sm:$0xff]
    %v1130 = vld [vmem:[%s11 + $0x50] sm:$0xff]
    %v1131 = vld [vmem:[%s11 + $0x58] sm:$0xff]
    %v1132 = vld [vmem:[%s11 + $0x60] sm:$0xff]
    %v1133 = vld [vmem:[%s11 + $0x68] sm:$0xff]
    %v1134 = vld [vmem:[%s11 + $0x70] sm:$0xff]
    %v1135 = vld [vmem:[%s11 + $0x78] sm:$0xff]
    %v1136 = vld [vmem:[%s11 + $0x80] sm:$0xff]
    %v1137 = vld [vmem:[%s11 + $0x88] sm:$0xff]
    %v1138 = vld [vmem:[%s11 + $0x90] sm:$0xff]
    %v1139 = vld [vmem:[%s11 + $0x98] sm:$0xff]
    %v1140 = vld [vmem:[%s11 + $0xa0] sm:$0xff]
    %v1141 = vld [vmem:[%s11 + $0xa8] sm:$0xff]
    %v1142 = vld [vmem:[%s11 + $0xb0] sm:$0xff]
    %v1143 = vld [vmem:[%s11 + $0xb8] sm:$0xff]
    %v1144 = vld [vmem:[%s11 + $0xc0] sm:$0xff]
    %v1145 = vld [vmem:[%s11 + $0xc8] sm:$0xff]
    %v1146 = vld [vmem:[%s11 + $0xd0] sm:$0xff]
    %v1147 = vld [vmem:[%s11 + $0xd8] sm:$0xff]
    %v1148 = vld [vmem:[%s11 + $0xe0] sm:$0xff]
    %v1149 = vld [vmem:[%s11 + $0xe8] sm:$0xff]
    %v1150 = vld [vmem:[%s11 + $0xf0] sm:$0xff]
    %v1151 = vld [vmem:[%s11 + $0xf8] sm:$0xff]
    %1152 = vmatprep.subr.mxu0 0.0
    %1153 = vmatpush1.msra.mxu0 %v1120
    %1154 = vmatprep.subr.mxu0 0.0
    %1155 = vmatpush1.msra.mxu0 %v1121
    %1156 = vmatprep.subr.mxu0 0.0
    %1157 = vmatpush1.msra.mxu0 %v1122
    %1158 = vmatprep.subr.mxu0 0.0
    %1159 = vmatpush1.msra.mxu0 %v1123
    %1160 = vmatprep.subr.mxu0 0.0
    %1161 = vmatpush1.msra.mxu0 %v1124
    %1162 = vmatprep.subr.mxu0 0.0
    %1163 = vmatpush1.msra.mxu0 %v1125
    %1164 = vmatprep.subr.mxu0 0.0
    %1165 = vmatpush1.msra.mxu0 %v1126
    %1166 = vmatprep.subr.mxu0 0.0
    %1167 = vmatpush1.msra.mxu0 %v1127
    %1168 = vmatprep.subr.mxu0 0.0
    %1169 = vmatpush1.msra.mxu0 %v1128
    %1170 = vmatprep.subr.mxu0 0.0
    %1171 = vmatpush1.msra.mxu0 %v1129
    %1172 = vmatprep.subr.mxu0 0.0
    %1173 = vmatpush1.msra.mxu0 %v1130
    %1174 = vmatprep.subr.mxu0 0.0
    %1175 = vmatpush1.msra.mxu0 %v1131
    %1176 = vmatprep.subr.mxu0 0.0
    %1177 = vmatpush1.msra.mxu0 %v1132
    %1178 = vmatprep.subr.mxu0 0.0
    %1179 = vmatpush1.msra.mxu0 %v1133
    %1180 = vmatprep.subr.mxu0 0.0
    %1181 = vmatpush1.msra.mxu0 %v1134
    %1182 = vmatprep.subr.mxu0 0.0
    %1183 = vmatpush1.msra.mxu0 %v1135
    %1184 = vmatprep.subr.mxu0 0.0
    %1185 = vmatpush1.msra.mxu0 %v1136
    %1186 = vmatprep.subr.mxu0 0.0
    %1187 = vmatpush1.msra.mxu0 %v1137
    %1188 = vmatprep.subr.mxu0 0.0
    %1189 = vmatpush1.msra.mxu0 %v1138
    %1190 = vmatprep.subr.mxu0 0.0
    %1191 = vmatpush1.msra.mxu0 %v1139
    %1192 = vmatprep.subr.mxu0 0.0
    %1193 = vmatpush1.msra.mxu0 %v1140
    %1194 = vmatprep.subr.mxu0 0.0
    %1195 = vmatpush1.msra.mxu0 %v1141
    %1196 = vmatprep.subr.mxu0 0.0
    %1197 = vmatpush1.msra.mxu0 %v1142
    %1198 = vmatprep.subr.mxu0 0.0
    %1199 = vmatpush1.msra.mxu0 %v1143
    %1200 = vmatprep.subr.mxu0 0.0
    %1201 = vmatpush1.msra.mxu0 %v1144
    %1202 = vmatprep.subr.mxu0 0.0
    %1203 = vmatpush1.msra.mxu0 %v1145
    %1204 = vmatprep.subr.mxu0 0.0
    %1205 = vmatpush1.msra.mxu0 %v1146
    %1206 = vmatprep.subr.mxu0 0.0
    %1207 = vmatpush1.msra.mxu0 %v1147
    %1208 = vmatprep.subr.mxu0 0.0
    %1209 = vmatpush1.msra.mxu0 %v1148
    %1210 = vmatprep.subr.mxu0 0.0
    %1211 = vmatpush1.msra.mxu0 %v1149
    %1212 = vmatprep.subr.mxu0 0.0
    %1213 = vmatpush1.msra.mxu0 %v1150
    %1214 = vmatprep.subr.mxu0 0.0
    %1215 = vmatpush1.msra.mxu0 %v1151
    %1216 = vmatprep.mubr.f32.mxu0 %v1119
    %1217 = vmatmul.mubr.f32.gmra.mrb[0].mxu0 %v1118
    %v1218 = vpop.f32.mrb[0].mxu0
    %v1219 = vadd.f32 0.0, %v1218
    %v1220 = vpop.f32.mrb[0].mxu0
    %1221 = vdwg.mxu0
    %v1222 = vmul.f32 %v1219, 0.03125
    %v1223 = vmul.f32 %v1222, %v1222
    %v1225 = vrot.slane %v1223, 7
    %v1227 = vsub.f32 %v1222, %v1225
    %v1228 = vmax.f32 %v1227, 0.0
    %v1229 = vadd.f32 %v1228, 1e-05
    %v1230 = vrsqrt.pop %v1229
    %v1231 = vsub.f32 0.0, %v1222
    %v1233 = vrot.slane %v1230, 1
    %v1235 = vmul.f32 %v1231, %v1233
    %v1237 = vrot.slane %v1235, 7
    %v1239 = vsel %vm1117, %v1233, %v1237
    %v1240 = vld [vmem:[%s12] sm:$0xff]
    %v1241 = vld [vmem:[%s12 + $0x8] sm:$0xff]
    %v1242 = vld [vmem:[%s12 + $0x10] sm:$0xff]
    %v1243 = vld [vmem:[%s12 + $0x18] sm:$0xff]
    %vm1244 = vcmask 130048
    %v1246 = vsel %vm1244, %v1239, 0
    %1248 = vmatprep.subr.mxu0 %v1241
    %1249 = vmatpush1.msra.mxu0 %v1240
    %1250 = vmatprep.subr.mxu0 %v1243
    %1251 = vmatpush1.msra.mxu0 %v1242
    %1252 = vmatprep.subr.mxu0 0.0
    %1253 = vmatpush1.msra.mxu0 0.0
    %1254 = vmatprep.subr.mxu0 0.0
    %1255 = vmatpush1.msra.mxu0 0.0
    %1256 = vmatprep.subr.mxu0 0.0
    %1257 = vmatpush1.msra.mxu0 0.0
    %1258 = vmatprep.subr.mxu0 0.0
    %1259 = vmatpush1.msra.mxu0 0.0
    %1260 = vmatprep.subr.mxu0 0.0
    %1261 = vmatpush1.msra.mxu0 0.0
    %1262 = vmatprep.subr.mxu0 0.0
    %1263 = vmatpush1.msra.mxu0 0.0
    %1264 = vmatprep.subr.mxu0 0.0
    %1265 = vmatpush1.msra.mxu0 0.0
    %1266 = vmatprep.subr.mxu0 0.0
    %1267 = vmatpush1.msra.mxu0 0.0
    %1268 = vmatprep.subr.mxu0 0.0
    %1269 = vmatpush1.msra.mxu0 0.0
    %1270 = vmatprep.subr.mxu0 0.0
    %1271 = vmatpush1.msra.mxu0 0.0
    %1272 = vmatprep.subr.mxu0 0.0
    %1273 = vmatpush1.msra.mxu0 0.0
    %1274 = vmatprep.subr.mxu0 0.0
    %1275 = vmatpush1.msra.mxu0 0.0
    %1276 = vmatprep.subr.mxu0 0.0
    %1277 = vmatpush1.msra.mxu0 0.0
    %1278 = vmatprep.subr.mxu0 0.0
    %1279 = vmatpush1.msra.mxu0 0.0
    %1280 = vmatprep.subr.mxu0 0.0
    %1281 = vmatpush1.msra.mxu0 0.0
    %1282 = vmatprep.subr.mxu0 0.0
    %1283 = vmatpush1.msra.mxu0 0.0
    %1284 = vmatprep.subr.mxu0 0.0
    %1285 = vmatpush1.msra.mxu0 0.0
    %1286 = vmatprep.subr.mxu0 0.0
    %1287 = vmatpush1.msra.mxu0 0.0
    %1288 = vmatprep.subr.mxu0 0.0
    %1289 = vmatpush1.msra.mxu0 0.0
    %1290 = vmatprep.subr.mxu0 0.0
    %1291 = vmatpush1.msra.mxu0 0.0
    %1292 = vmatprep.subr.mxu0 0.0
    %1293 = vmatpush1.msra.mxu0 0.0
    %1294 = vmatprep.subr.mxu0 0.0
    %1295 = vmatpush1.msra.mxu0 0.0
    %1296 = vmatprep.subr.mxu0 0.0
    %1297 = vmatpush1.msra.mxu0 0.0
    %1298 = vmatprep.subr.mxu0 0.0
    %1299 = vmatpush1.msra.mxu0 0.0
    %1300 = vmatprep.subr.mxu0 0.0
    %1301 = vmatpush1.msra.mxu0 0.0
    %1302 = vmatprep.subr.mxu0 0.0
    %1303 = vmatpush1.msra.mxu0 0.0
    %1304 = vmatprep.subr.mxu0 0.0
    %1305 = vmatpush1.msra.mxu0 0.0
    %1306 = vmatprep.subr.mxu0 0.0
    %1307 = vmatpush1.msra.mxu0 0.0
    %1308 = vmatprep.subr.mxu0 0.0
    %1309 = vmatpush1.msra.mxu0 0.0
    %1310 = vmatprep.subr.mxu0 0.0
    %1311 = vmatpush1.msra.mxu0 0.0
    %1312 = vmatprep.mubr.f32.mxu0 0.0
    %1313 = vmatmul.mubr.f32.gmra.mrb[0].mxu0 %v1246
    %v1314 = vpop.f32.mrb[0].mxu0
    %v1315 = vadd.f32 0.0, %v1314
    %v1316 = vpop.f32.mrb[0].mxu0
    %v1317 = vadd.f32 0.0, %v1316
    %1318 = vdwg.mxu0
    %v1319 = vlaneseq
    %v1320 = vshrl.u32 %v1319, 7
    %v1321 = vsub.s32 0, %v1320
    %v1322 = vrot.slane %v1315, %v1321
    %v1323 = vlaneseq
    %v1324 = vshrl.u32 %v1323, 7
    %v1325 = vsub.s32 0, %v1324
    %v1326 = vrot.slane %v1317, %v1325
    %v1327 = vmul.f32 %v1082, %v1322
    %v1328 = vmul.f32 %v1083, %v1326
    %v1329 = vlaneseq
    %v1330 = vshrl.u32 %v1329, 7
    %v1331 = vsub.s32 1, %v1330
    %v1332 = vrot.slane %v1315, %v1331
    %v1333 = vlaneseq
    %v1334 = vshrl.u32 %v1333, 7
    %v1335 = vsub.s32 1, %v1334
    %v1336 = vrot.slane %v1317, %v1335
    %v1337 = vadd.f32 %v1327, %v1332
    %v1338 = vadd.f32 %v1328, %v1336
    %vm1339 = vcmp.ge.f32.partialorder %v1337, 0.0
    %vm1340 = vcmp.ge.f32.partialorder %v1338, 0.0
    %v1341 = vmul.f32 %v1337, 0.01
    %v1342 = vmul.f32 %v1338, 0.01
    %v1343 = vsel %vm1339, %v1337, %v1341
    %v1344 = vsel %vm1340, %v1338, %v1342
    %v1345 = vpack.c.bf16 %v1343, %v1343
    %v1346 = vpack.c.bf16 %v1344, %v1344
    %v1347 = vld [vmem:[#allocation7] sm:$0xf]
    %v1348 = vld [vmem:[#allocation7 + $0x4] sm:$0xf]
    %v1349 = vld [vmem:[#allocation7 + $0x8] sm:$0xf]
    %v1350 = vld [vmem:[#allocation7 + $0xc] sm:$0xf]
    %v1351 = vld [vmem:[#allocation7 + $0x10] sm:$0xf]
    %v1352 = vld [vmem:[#allocation7 + $0x14] sm:$0xf]
    %v1353 = vld [vmem:[#allocation7 + $0x18] sm:$0xf]
    %v1354 = vld [vmem:[#allocation7 + $0x1c] sm:$0xf]
    %v1355 = vld [vmem:[#allocation7 + $0x20] sm:$0xf]
    %v1356 = vld [vmem:[#allocation7 + $0x24] sm:$0xf]
    %v1357 = vld [vmem:[#allocation7 + $0x28] sm:$0xf]
    %v1358 = vld [vmem:[#allocation7 + $0x2c] sm:$0xf]
    %v1359 = vld [vmem:[#allocation7 + $0x30] sm:$0xf]
    %v1360 = vld [vmem:[#allocation7 + $0x34] sm:$0xf]
    %v1361 = vld [vmem:[#allocation7 + $0x38] sm:$0xf]
    %v1362 = vld [vmem:[#allocation7 + $0x3c] sm:$0xf]
    %v1363 = vld [vmem:[#allocation7 + $0x40] sm:$0xf]
    %v1364 = vld [vmem:[#allocation7 + $0x44] sm:$0xf]
    %v1365 = vld [vmem:[#allocation7 + $0x48] sm:$0xf]
    %v1366 = vld [vmem:[#allocation7 + $0x4c] sm:$0xf]
    %v1367 = vld [vmem:[#allocation7 + $0x50] sm:$0xf]
    %v1368 = vld [vmem:[#allocation7 + $0x54] sm:$0xf]
    %v1369 = vld [vmem:[#allocation7 + $0x58] sm:$0xf]
    %v1370 = vld [vmem:[#allocation7 + $0x5c] sm:$0xf]
    %v1371 = vld [vmem:[#allocation7 + $0x60] sm:$0xf]
    %v1372 = vld [vmem:[#allocation7 + $0x64] sm:$0xf]
    %v1373 = vld [vmem:[#allocation7 + $0x68] sm:$0xf]
    %v1374 = vld [vmem:[#allocation7 + $0x6c] sm:$0xf]
    %v1375 = vld [vmem:[#allocation7 + $0x70] sm:$0xf]
    %v1376 = vld [vmem:[#allocation7 + $0x74] sm:$0xf]
    %v1377 = vld [vmem:[#allocation7 + $0x78] sm:$0xf]
    %v1378 = vld [vmem:[#allocation7 + $0x7c] sm:$0xf]
    %v1379 = vld [vmem:[%s14] sm:$0x1]
    %v1381 = vlaneseq
    %v1382 = vshrl.u32 %v1381, 7
    %v1383 = vsub.s32 0, %v1382
    %v1384 = vrot.slane %v1379, %v1383
    %v1418 = vunpack.c.l.b16 %v1347
    %v1419 = vunpack.c.l.b16 %v1348
    %v1420 = vunpack.c.l.b16 %v1349
    %v1421 = vunpack.c.l.b16 %v1350
    %v1422 = vunpack.c.l.b16 %v1351
    %v1423 = vunpack.c.l.b16 %v1352
    %v1424 = vunpack.c.l.b16 %v1353
    %v1425 = vunpack.c.l.b16 %v1354
    %v1426 = vunpack.c.l.b16 %v1355
    %v1427 = vunpack.c.l.b16 %v1356
    %v1428 = vunpack.c.l.b16 %v1357
    %v1429 = vunpack.c.l.b16 %v1358
    %v1430 = vunpack.c.l.b16 %v1359
    %v1431 = vunpack.c.l.b16 %v1360
    %v1432 = vunpack.c.l.b16 %v1361
    %v1433 = vunpack.c.l.b16 %v1362
    %v1434 = vunpack.c.l.b16 %v1363
    %v1435 = vunpack.c.l.b16 %v1364
    %v1436 = vunpack.c.l.b16 %v1365
    %v1437 = vunpack.c.l.b16 %v1366
    %v1438 = vunpack.c.l.b16 %v1367
    %v1439 = vunpack.c.l.b16 %v1368
    %v1440 = vunpack.c.l.b16 %v1369
    %v1441 = vunpack.c.l.b16 %v1370
    %v1442 = vunpack.c.l.b16 %v1371
    %v1443 = vunpack.c.l.b16 %v1372
    %v1444 = vunpack.c.l.b16 %v1373
    %v1445 = vunpack.c.l.b16 %v1374
    %v1446 = vunpack.c.l.b16 %v1375
    %v1447 = vunpack.c.l.b16 %v1376
    %v1448 = vunpack.c.l.b16 %v1377
    %v1449 = vunpack.c.l.b16 %v1378
    %v1450 = vpack.c.b16 %v1419, %v1418
    %v1451 = vpack.c.b16 %v1421, %v1420
    %v1452 = vpack.c.b16 %v1423, %v1422
    %v1453 = vpack.c.b16 %v1425, %v1424
    %v1454 = vpack.c.b16 %v1427, %v1426
    %v1455 = vpack.c.b16 %v1429, %v1428
    %v1456 = vpack.c.b16 %v1431, %v1430
    %v1457 = vpack.c.b16 %v1433, %v1432
    %v1458 = vpack.c.b16 %v1435, %v1434
    %v1459 = vpack.c.b16 %v1437, %v1436
    %v1460 = vpack.c.b16 %v1439, %v1438
    %v1461 = vpack.c.b16 %v1441, %v1440
    %v1462 = vpack.c.b16 %v1443, %v1442
    %v1463 = vpack.c.b16 %v1445, %v1444
    %v1464 = vpack.c.b16 %v1447, %v1446
    %v1465 = vpack.c.b16 %v1449, %v1448
    %1482 = vmatprep.subr.bf16.mxu0 0
    %1483 = vmatpush1.bf16.msra.mxu0 %v1450
    %1484 = vmatprep.subr.bf16.mxu0 0
    %1485 = vmatpush1.bf16.msra.mxu0 %v1451
    %1486 = vmatprep.subr.bf16.mxu0 0
    %1487 = vmatpush1.bf16.msra.mxu0 %v1452
    %1488 = vmatprep.subr.bf16.mxu0 0
    %1489 = vmatpush1.bf16.msra.mxu0 %v1453
    %1490 = vmatprep.subr.bf16.mxu0 0
    %1491 = vmatpush1.bf16.msra.mxu0 %v1454
    %1492 = vmatprep.subr.bf16.mxu0 0
    %1493 = vmatpush1.bf16.msra.mxu0 %v1455
    %1494 = vmatprep.subr.bf16.mxu0 0
    %1495 = vmatpush1.bf16.msra.mxu0 %v1456
    %1496 = vmatprep.subr.bf16.mxu0 0
    %1497 = vmatpush1.bf16.msra.mxu0 %v1457
    %1498 = vmatprep.subr.bf16.mxu0 0
    %1499 = vmatpush1.bf16.msra.mxu0 %v1458
    %1500 = vmatprep.subr.bf16.mxu0 0
    %1501 = vmatpush1.bf16.msra.mxu0 %v1459
    %1502 = vmatprep.subr.bf16.mxu0 0
    %1503 = vmatpush1.bf16.msra.mxu0 %v1460
    %1504 = vmatprep.subr.bf16.mxu0 0
    %1505 = vmatpush1.bf16.msra.mxu0 %v1461
    %1506 = vmatprep.subr.bf16.mxu0 0
    %1507 = vmatpush1.bf16.msra.mxu0 %v1462
    %1508 = vmatprep.subr.bf16.mxu0 0
    %1509 = vmatpush1.bf16.msra.mxu0 %v1463
    %1510 = vmatprep.subr.bf16.mxu0 0
    %1511 = vmatpush1.bf16.msra.mxu0 %v1464
    %1512 = vmatprep.subr.bf16.mxu0 0
    %1513 = vmatpush1.bf16.msra.mxu0 %v1465
    %1514 = vmatprep.mubr.bf16.mxu0 %v1346
    %1515 = vmatmul.mubr.bf16.gmra.mrb[0].mxu0 %v1345
    %v1516 = vpop.f32.mrb[0].mxu0
    %v1517 = vadd.f32 %v1384, %v1516
    %v1518 = vpop.f32.mrb[0].mxu0
    %v1519 = vpop.f32.mrb[0].mxu0
    %v1520 = vpop.f32.mrb[0].mxu0
    %1521 = vdwg.mxu0
    %v1522 = vtanh.pop %v1517
    %1523 = vst [vmem:[%s15] sm:$0xff] %v1522
    // Predicated region
    $region78: #{generator_forward.1} parent=1 // pred_check
      _
    $region79: #{generator_forward.1} parent=1 // pred_check_branch
      %1525 = sbr.rel (0) target = $region81
    $region80: #{generator_forward.1} parent=1 // pred_region
      _
    $region81: #{generator_forward.1} parent=1 // pred_fallthru
      _
    // Predicated region
    $region82: #{generator_forward.1} parent=1 // pred_check
      _
    $region83: #{generator_forward.1} parent=1 // pred_check_branch
      %1527 = sbr.rel (0) target = $region85
    $region84: #{generator_forward.1} parent=1 // pred_region
      _
    $region85: #{generator_forward.1} parent=1 // pred_fallthru
      _
    %1528 = vsyncpa [#allocation3], 1
    %1529 = vsyncpa [#allocation5], 1
    %1530 = vsyncpa [#allocation8], 1

</llo_original>
